<compile_context>
chip_gen: v7x
topology: tpu7x:2x2x1
jax: 0.10.0
libtpu: 0.0.40
codegen_flags: <defaults>
</compile_context>

<pallas_src>
import functools

import jax
import jax.numpy as jnp
from jax.experimental import pallas as pl
from jax.experimental.pallas import tpu as pltpu

LANE = 128


def _round_up(x, m):
    return (x + m - 1) // m * m


def _choose_tile(dim, max_tile, align=8):
    """Largest tile <= max_tile that divides `dim` and is a multiple of `align`;
    falls back to the full extent (always a legal block) if dim % align != 0."""
    if dim % align != 0:
        return dim
    t = min(max_tile, dim)
    t -= t % align
    t = max(t, align)
    while dim % t != 0:
        t -= align
    return t


def _choose_batch_tile(batch, cap=32):
    """Largest divisor of `batch` <= cap that still leaves >= 2 grid blocks on
    the parallel axis (so v7x megacore can shard it); falls back to the largest
    divisor when batch == 1."""
    if batch <= 1:
        return max(batch, 1)
    divisors = [t for t in range(1, min(cap, batch) + 1) if batch % t == 0]
    two_block = [t for t in divisors if batch // t >= 2]
    return max(two_block) if two_block else max(divisors)


# -----------------------------------------------------------------------------
# Fused kernel: token-sum streaming reduce -> (mean -> patch-embed -> fc) head
#   x_ref   : (block_b, block_n, K)   bf16   raw patch pixels (unpadded K)
#   wpe_ref : (K, D)                  bf16   patch-embed weight (resident)
#   bpe_ref : (1, D)                  f32    patch-embed bias   (resident)
#   wfc_ref : (D, OUT_pad)            bf16   fc weight          (resident)
#   bfc_ref : (1, OUT_pad)            f32    fc bias            (resident)
#   out_ref : (block_b, 1, OUT_pad)   f32    lane-dense fc output
#   acc_ref : (block_b, K)            f32    VMEM pixel token-sum accumulator
# -----------------------------------------------------------------------------
def fused_mae_kernel(x_ref, wpe_ref, bpe_ref, wfc_ref, bfc_ref,
                     out_ref, acc_ref, *, inv_n):
    n_idx = pl.program_id(1)

    @pl.when(n_idx == 0)
    def _init():
        acc_ref[...] = jnp.zeros_like(acc_ref)

    # Reduce-hoist: sum raw patch pixels over the token axis (sublane reduce on
    # the XLU/VPU, f32 accumulate). No per-token matmul, no big intermediate.
    acc_ref[...] += jnp.sum(x_ref[...].astype(jnp.float32), axis=1)

    @pl.when(n_idx == pl.num_programs(1) - 1)
    def _finalize():
        # mean over tokens; conv bias added once (mean(x_i @ W + b) = mean(x_i) @ W + b)
        pooled_pix = (acc_ref[...] * inv_n).astype(jnp.bfloat16)           # (bb, K)
        pooled = (
            jnp.dot(pooled_pix, wpe_ref[...], preferred_element_type=jnp.float32)
            + bpe_ref[...]
        )                                                                   # (bb, D) f32
        logits = (
            jnp.dot(pooled.astype(jnp.bfloat16), wfc_ref[...],
                    preferred_element_type=jnp.float32)
            + bfc_ref[...]
        )                                                                   # (bb, OUT_pad)
        out_ref[:, 0, :] = logits


# -----------------------------------------------------------------------------
# One-time parameter preparation (outside the hot path): transpose, pad, cast.
# -----------------------------------------------------------------------------
def prepare_params(conv_w, conv_b, fc_w, fc_b):
    D, C, p, _ = conv_w.shape
    K = C * p * p                                 # NOT padded in HBM anymore
    n_classes = fc_w.shape[0]
    out_pad = _round_up(n_classes, LANE)

    w_pe = conv_w.reshape(D, K).T.astype(jnp.bfloat16)       # (K, D), im2col order
    b_pe = conv_b.reshape(1, D).astype(jnp.float32)

    w_fc = jnp.pad(fc_w.T, ((0, 0), (0, out_pad - n_classes))).astype(jnp.bfloat16)
    b_fc = jnp.pad(fc_b.reshape(1, -1).astype(jnp.float32),
                   ((0, 0), (0, out_pad - n_classes)))

    return {
        "w_pe": w_pe, "b_pe": b_pe, "w_fc": w_fc, "b_fc": b_fc,
        "patch": p, "K": K, "D": D,
        "n_classes": n_classes, "out_pad": out_pad,
    }


# -----------------------------------------------------------------------------
# Forward: im2col (layout glue, fusible into the kernel input) + fused kernel.
# -----------------------------------------------------------------------------
def tuned_mae_forward(x_nchw, prep):
    p = prep["patch"]
    K, D = prep["K"], prep["D"]
    out_pad, n_classes = prep["out_pad"], prep["n_classes"]

    B, C, H, W = x_nchw.shape
    nh, nw = H // p, W // p
    N = nh * nw

    # im2col patch extraction (B, N, K) in bf16 — no K zero-padding in HBM.
    # allow_input_fusion below lets XLA fuse this producer into the kernel's
    # input stream instead of materialising a second copy of x in HBM.
    patches = (
        x_nchw.reshape(B, C, nh, p, nw, p)
        .transpose(0, 2, 4, 1, 3, 5)
        .reshape(B, N, K)
        .astype(jnp.bfloat16)
    )

    # Tiles: exact divisors on both axes (no partial token blocks -> inv_n is
    # exact); >= 2 blocks on the parallel B axis whenever B >= 2 (megacore).
    block_b = _choose_batch_tile(B, 32)
    block_n = _choose_tile(N, 256)
    grid = (B // block_b, N // block_n)

    kernel = functools.partial(fused_mae_kernel, inv_n=1.0 / N)

    out_padded = pl.pallas_call(
        kernel,
        out_shape=jax.ShapeDtypeStruct((B, 1, out_pad), jnp.float32),
        grid_spec=pltpu.PrefetchScalarGridSpec(
            num_scalar_prefetch=0,
            grid=grid,
            in_specs=[
                pl.BlockSpec((block_b, block_n, K), lambda b, n: (b, n, 0)),
                pl.BlockSpec((K, D), lambda b, n: (0, 0)),           # resident
                pl.BlockSpec((1, D), lambda b, n: (0, 0)),           # resident
                pl.BlockSpec((D, out_pad), lambda b, n: (0, 0)),     # resident
                pl.BlockSpec((1, out_pad), lambda b, n: (0, 0)),     # resident
            ],
            out_specs=pl.BlockSpec((block_b, 1, out_pad), lambda b, n: (b, 0, 0)),
            scratch_shapes=[pltpu.VMEM((block_b, K), jnp.float32)],
        ),
        compiler_params=pltpu.CompilerParams(
            dimension_semantics=("parallel", "arbitrary"),
            vmem_limit_bytes=32 * 1024 * 1024,   # well under v7x 64 MiB physical
            allow_input_fusion=[True, False, False, False, False],
        ),
    )(patches, prep["w_pe"], prep["b_pe"], prep["w_fc"], prep["b_fc"])

    return out_padded[:, 0, :n_classes]


if __name__ == "__main__":
    # Small shapes consistent with the module: fc expects 1024 input features.
    B, C, H, W = 2, 3, 16, 16
    PATCH = 8
    EMBED = 1024
    NUM_CLASSES = 7

    key = jax.random.PRNGKey(0)
    k_x, k_cw, k_cb, k_fw, k_fb = jax.random.split(key, 5)

    x = jax.random.normal(k_x, (B, C, H, W), dtype=jnp.float32)

    # Deterministic synthetic weights: Conv2d(C, EMBED, PATCH, PATCH) + Linear(1024, 7).
    conv_w = 0.02 * jax.random.normal(k_cw, (EMBED, C, PATCH, PATCH), jnp.float32)
    conv_b = 0.01 * jax.random.normal(k_cb, (EMBED,), jnp.float32)
    fc_w = 0.02 * jax.random.normal(k_fw, (NUM_CLASSES, EMBED), jnp.float32)
    fc_b = 0.01 * jax.random.normal(k_fb, (NUM_CLASSES,), jnp.float32)

    prep = prepare_params(conv_w, conv_b, fc_w, fc_b)

    out = tuned_mae_forward(x, prep)
    out = jax.block_until_ready(out)
    assert out.shape == (B, NUM_CLASSES), out.shape

    # Pure-JAX f32 reference of the same math (bf16 MXU inputs -> loosened tol).
    nh, nw = H // PATCH, W // PATCH
    patches_ref = (
        x.reshape(B, C, nh, PATCH, nw, PATCH)
        .transpose(0, 2, 4, 1, 3, 5)
        .reshape(B * nh * nw, C * PATCH * PATCH)
    )
    enc_ref = (patches_ref @ conv_w.reshape(EMBED, -1).T + conv_b).reshape(
        B, nh * nw, EMBED
    )
    ref = enc_ref.mean(axis=1) @ fc_w.T + fc_b
    assert jnp.allclose(out, ref, atol=1e-2, rtol=1e-2), (
        float(jnp.max(jnp.abs(out - ref)))
    )

    print("KERNEL_OK")
</pallas_src>

<mosaic_0001>
module attributes {stable_mosaic.version = 11 : i64} {
  func.func @fused_mae_kernel(%arg0: i32, %arg1: i32, %arg2: memref<1x4x192xbf16, #tpu.memory_space<vmem>>, %arg3: memref<192x1024xbf16, #tpu.memory_space<vmem>>, %arg4: memref<1x1024xf32, #tpu.memory_space<vmem>>, %arg5: memref<1024x128xbf16, #tpu.memory_space<vmem>>, %arg6: memref<1x128xf32, #tpu.memory_space<vmem>>, %arg7: memref<1x1x128xf32, #tpu.memory_space<vmem>>, %arg8: memref<1x192xf32, #tpu.memory_space<vmem>>) attributes {dimension_semantics = [#tpu.dimension_semantics<parallel>, #tpu.dimension_semantics<arbitrary>], iteration_bounds = array<i64: 2, 1>, scalar_prefetch = 0 : i64, scratch_operands = 1 : i64, tpu.core_type = #tpu.core_type<tc>, window_params = [{transform_indices = @transform_0, window_bounds = array<i64: 1, 4, 192>}, {pipeline_mode = #tpu.pipeline_mode<synchronous>, transform_indices = @transform_1, window_bounds = array<i64: 192, 1024>}, {pipeline_mode = #tpu.pipeline_mode<synchronous>, transform_indices = @transform_2, window_bounds = array<i64: 1, 1024>}, {pipeline_mode = #tpu.pipeline_mode<synchronous>, transform_indices = @transform_3, window_bounds = array<i64: 1024, 128>}, {pipeline_mode = #tpu.pipeline_mode<synchronous>, transform_indices = @transform_4, window_bounds = array<i64: 1, 128>}, {transform_indices = @transform_5, window_bounds = array<i64: 1, 1, 128>}]} {
    %c0_i32 = arith.constant 0 : i32
    %0 = arith.cmpi eq, %arg1, %c0_i32 : i32
    %1 = arith.extui %0 : i1 to i32
    %c0_i32_0 = arith.constant 0 : i32
    %2 = arith.cmpi ne, %1, %c0_i32_0 : i32
    scf.if %2 {
      %cst_9 = arith.constant 0.000000e+00 : f32
      %12 = vector.broadcast %cst_9 : f32 to vector<1x192xf32>
      %c0_10 = arith.constant 0 : index
      %c0_11 = arith.constant 0 : index
      %13 = vector.load %arg8[%c0_10, %c0_11] : memref<1x192xf32, #tpu.memory_space<vmem>>, vector<1x192xf32>
      tpu.vector_store %arg8[%c0_10, %c0_11], %12 {strides = array<i32>} : memref<1x192xf32, #tpu.memory_space<vmem>>, vector<1x192xf32>,
    } else {
    }
    %c0 = arith.constant 0 : index
    %c0_1 = arith.constant 0 : index
    %3 = vector.load %arg8[%c0, %c0_1] : memref<1x192xf32, #tpu.memory_space<vmem>>, vector<1x192xf32>
    %c0_2 = arith.constant 0 : index
    %c0_3 = arith.constant 0 : index
    %c0_4 = arith.constant 0 : index
    %4 = vector.load %arg2[%c0_2, %c0_3, %c0_4] : memref<1x4x192xbf16, #tpu.memory_space<vmem>>, vector<1x4x192xbf16>
    %5 = arith.extf %4 : vector<1x4x192xbf16> to vector<1x4x192xf32>
    %cst = arith.constant dense<0.000000e+00> : vector<1x192xf32>
    %6 = vector.multi_reduction <add>, %5, %cst [1] : vector<1x4x192xf32> to vector<1x192xf32>
    %7 = arith.addf %3, %6 : vector<1x192xf32>
    %c0_5 = arith.constant 0 : index
    %c0_6 = arith.constant 0 : index
    %8 = vector.load %arg8[%c0_5, %c0_6] : memref<1x192xf32, #tpu.memory_space<vmem>>, vector<1x192xf32>
    tpu.vector_store %arg8[%c0_5, %c0_6], %7 {strides = array<i32>} : memref<1x192xf32, #tpu.memory_space<vmem>>, vector<1x192xf32>,
    %c0_i32_7 = arith.constant 0 : i32
    %9 = arith.cmpi eq, %arg1, %c0_i32_7 : i32
    %10 = arith.extui %9 : i1 to i32
    %c0_i32_8 = arith.constant 0 : i32
    %11 = arith.cmpi ne, %10, %c0_i32_8 : i32
    scf.if %11 {
      %c0_9 = arith.constant 0 : index
      %c0_10 = arith.constant 0 : index
      %12 = vector.load %arg8[%c0_9, %c0_10] : memref<1x192xf32, #tpu.memory_space<vmem>>, vector<1x192xf32>
      %cst_11 = arith.constant 2.500000e-01 : f32
      %13 = vector.broadcast %cst_11 : f32 to vector<1x192xf32>
      %14 = arith.mulf %12, %13 : vector<1x192xf32>
      %15 = arith.truncf %14 : vector<1x192xf32> to vector<1x192xbf16>
      %c0_12 = arith.constant 0 : index
      %c0_13 = arith.constant 0 : index
      %16 = vector.load %arg3[%c0_12, %c0_13] : memref<192x1024xbf16, #tpu.memory_space<vmem>>, vector<192x1024xbf16>
      %cst_14 = arith.constant dense<0.000000e+00> : vector<1x1024xf32>
      %17 = tpu.matmul %15, %16, %cst_14 {dimension_numbers = #tpu.dot_dimension_numbers<[1], [0], [0], [1], [0, 0, 1, 1], [], []>} : vector<1x192xbf16>, vector<192x1024xbf16>, vector<1x1024xf32> -> vector<1x1024xf32>
      %c0_15 = arith.constant 0 : index
      %c0_16 = arith.constant 0 : index
      %18 = vector.load %arg4[%c0_15, %c0_16] : memref<1x1024xf32, #tpu.memory_space<vmem>>, vector<1x1024xf32>
      %19 = arith.addf %17, %18 : vector<1x1024xf32>
      %20 = arith.truncf %19 : vector<1x1024xf32> to vector<1x1024xbf16>
      %c0_17 = arith.constant 0 : index
      %c0_18 = arith.constant 0 : index
      %21 = vector.load %arg5[%c0_17, %c0_18] : memref<1024x128xbf16, #tpu.memory_space<vmem>>, vector<1024x128xbf16>
      %cst_19 = arith.constant dense<0.000000e+00> : vector<1x128xf32>
      %22 = tpu.matmul %20, %21, %cst_19 {dimension_numbers = #tpu.dot_dimension_numbers<[1], [0], [0], [1], [0, 0, 1, 1], [], []>} : vector<1x1024xbf16>, vector<1024x128xbf16>, vector<1x128xf32> -> vector<1x128xf32>
      %c0_20 = arith.constant 0 : index
      %c0_21 = arith.constant 0 : index
      %23 = vector.load %arg6[%c0_20, %c0_21] : memref<1x128xf32, #tpu.memory_space<vmem>>, vector<1x128xf32>
      %24 = arith.addf %22, %23 : vector<1x128xf32>
      %c0_22 = arith.constant 0 : index
      %c0_23 = arith.constant 0 : index
      %c0_24 = arith.constant 0 : index
      %25 = vector.load %arg7[%c0_22, %c0_23, %c0_24] : memref<1x1x128xf32, #tpu.memory_space<vmem>>, vector<1x1x128xf32>
      %26 = vector.shape_cast %25 : vector<1x1x128xf32> to vector<1x128xf32>
      %27 = vector.shape_cast %24 : vector<1x128xf32> to vector<1x1x128xf32>
      tpu.vector_store %arg7[%c0_22, %c0_23, %c0_24], %27 {strides = array<i32>} : memref<1x1x128xf32, #tpu.memory_space<vmem>>, vector<1x1x128xf32>,
    } else {
    }
    return
  }
  func.func @transform_0(%arg0: i32, %arg1: i32) -> (i32, i32, i32) {
    %c0_i32 = arith.constant 0 : i32
    %c0_i32_0 = arith.constant 0 : i32
    return %arg0, %arg1, %c0_i32 : i32, i32, i32
  }
  func.func @transform_1(%arg0: i32, %arg1: i32) -> (i32, i32) {
    %c0_i32 = arith.constant 0 : i32
    %c0_i32_0 = arith.constant 0 : i32
    %c0_i32_1 = arith.constant 0 : i32
    return %c0_i32, %c0_i32_0 : i32, i32
  }
  func.func @transform_2(%arg0: i32, %arg1: i32) -> (i32, i32) {
    %c0_i32 = arith.constant 0 : i32
    %c0_i32_0 = arith.constant 0 : i32
    %c0_i32_1 = arith.constant 0 : i32
    return %c0_i32, %c0_i32_0 : i32, i32
  }
  func.func @transform_3(%arg0: i32, %arg1: i32) -> (i32, i32) {
    %c0_i32 = arith.constant 0 : i32
    %c0_i32_0 = arith.constant 0 : i32
    %c0_i32_1 = arith.constant 0 : i32
    return %c0_i32, %c0_i32_0 : i32, i32
  }
  func.func @transform_4(%arg0: i32, %arg1: i32) -> (i32, i32) {
    %c0_i32 = arith.constant 0 : i32
    %c0_i32_0 = arith.constant 0 : i32
    %c0_i32_1 = arith.constant 0 : i32
    return %c0_i32, %c0_i32_0 : i32, i32
  }
  func.func @transform_5(%arg0: i32, %arg1: i32) -> (i32, i32, i32) {
    %c0_i32 = arith.constant 0 : i32
    %c0_i32_0 = arith.constant 0 : i32
    %c0_i32_1 = arith.constant 0 : i32
    return %arg0, %c0_i32, %c0_i32_0 : i32, i32, i32
  }
}

</mosaic_0001>

<llo_original>
// kernel: tpu_custom_call.1
$region0: #{tpu_custom_call.1}
  #allocation0 [shape = 'u32[]', space=smem, size = 0x4, offset = 0x4, fixed_abs, tag = 'smem constant byte address 0x4 - core index']
  #allocation1 [shape = 'u32[144,128]{1,0:T(1,128)}', space=vmem, size = 0x12000, scoped, tag = 'internal scratch']
  #allocation2 [shape = 'f32[1,192]{1,0:T(1,128)}', space=vmem, size = 0x400, scoped, tag = 'scratch operand']
  %s0 = inlined_call_operand.hbm [shape: bf16[2,4,192], index: 0, kind: input, shape index: {}]
  %s1 = inlined_call_operand.hbm [shape: bf16[192,1024], index: 1, kind: input, shape index: {}]
  %s2 = inlined_call_operand.hbm [shape: f32[1,1024], index: 2, kind: input, shape index: {}]
  %s3 = inlined_call_operand.hbm [shape: bf16[1024,128], index: 3, kind: input, shape index: {}]
  %s4 = inlined_call_operand.vmem [shape: f32[1,128], index: 4, kind: input, shape index: {}]
  %s5 = inlined_call_operand.hbm [shape: f32[2,1,128], index: 5, kind: output, shape index: {}]
  %s6 = sld [smem:[#allocation0]]
  $region77: #{tpu_custom_call.1} parent=0
    _
  %s8 = ssub.s32 1, %s6
  %s9 = scalar_select 0, %s8, %s6
  $region1: #{tpu_custom_call.1} parent=0
    #allocation3 [shape = 'u8[4096]{0}', space=vmem, size = 0x1000, scoped, tag = 'input window, operand 0']
    #allocation4 [shape = 's32[2]{0}', space=sflag, size = 0x8, scoped, tag = 'scoped memory for tpu_custom_call.1']
    #allocation5 [shape = 's32[2]{0}', space=sflag, size = 0x8, scoped, tag = 'scoped memory for tpu_custom_call.1']
    #allocation6 [shape = 'u8[393216]{0}', space=vmem, size = 0x60000, scoped, tag = 'input window, operand 1, single buffered']
    #allocation7 [shape = 's32[1]{0}', space=sflag, size = 0x4, scoped, tag = 'scoped memory for tpu_custom_call.1']
    #allocation8 [shape = 'u8[4096]{0}', space=vmem, size = 0x1000, scoped, tag = 'input window, operand 2, single buffered']
    #allocation9 [shape = 'u8[262144]{0}', space=vmem, size = 0x40000, scoped, tag = 'input window, operand 3, single buffered']
    #allocation10 [shape = 's32[1]{0}', space=sflag, size = 0x4, scoped, tag = 'scoped memory for tpu_custom_call.1']
    #allocation11 [shape = 'u8[1024]{0}', space=vmem, size = 0x400, scoped, tag = 'output window, operand 0']
    %10 = vsyncpa [#allocation4], 0
    %s11 = scalar_lea.sflag [#allocation4], 1
    %12 = vsyncpa %s11, 0
    %13 = vsyncpa [#allocation7], 0
    %14 = vsyncpa [#allocation10], 0
    %15 = vsyncpa [#allocation5], 0
    %s16 = scalar_lea.sflag [#allocation5], 1
    %17 = vsyncpa %s16, 0
    loop: start=0, step=1, limit=4
    $region2: #{tpu_custom_call.1} parent=1 // loop_pre_header
      _
    $region3: #{tpu_custom_call.1} parent=1 // loop_header
      %s19 = sphi 0, %s23
      %p20 = scmp.ge.s32.totalorder %s19, 4
      %s26 = sphi 0, %s38
      %s27 = sphi 0, %s34
      %s28 = sphi 0, %s26
      %s29 = sphi 0, %s27
      %s30 = sphi 0, %s28
      %s31 = sphi 0, %s29
      %s43 = sphi 0, %s45
      %s46 = sphi 0, %s43
      %s47 = sphi 0, %s46
      %s63 = sphi 0, %s47
      %s67 = sphi 0, %s67
      %s69 = sphi 0, %s67
      %s70 = sphi 0, %s69
      %s84 = sphi 0, %s70
      %s88 = sphi 0, %s88
      %s90 = sphi 0, %s88
      %s91 = sphi 0, %s90
      %s105 = sphi 0, %s91
      %s109 = sphi 0, %s109
      %s111 = sphi 0, %s109
      %s112 = sphi 0, %s111
      %s126 = sphi 0, %s112
      %s130 = sphi 0, %s130
      %s132 = sphi 0, %s130
      %s133 = sphi 0, %s132
      %s147 = sphi 0, %s133
      %s153 = sphi 0, %s155
      %s156 = sphi 0, %s153
      %s157 = sphi 0, %s156
      %s173 = sphi 0, %s157
    $region4: #{tpu_custom_call.1} parent=1 // loop_header_branch
      %22 = sbr.rel (%p20) target = $region8
    $region5: #{tpu_custom_call.1} parent=1 // loop_body
      %s24 = ssub.s32 %s19, 1
      %s25 = ssub.s32 %s19, 2
      %s32 = sadd.s32 1, %s27
      %p33 = scmp.ge.s32.totalorder %s32, 1
      %s34 = scalar_select %p33, 0, %s32
      %s35 = sadd.s32 1, %s26
      %s36 = scalar_select %p33, %s35, %s26
      %p37 = scmp.ge.s32.totalorder %s36, 2
      %s38 = scalar_select %p37, 0, %s36
      %s39 = ssub.s32 %s26, %s38
      %s40 = ssub.s32 %s27, %s34
      %s41 = sor.u32 %s39, %s40
      %p42 = scmp.eq.s32.totalorder %s41, 0
      %s44 = sadd.s32 %s43, 1
      %s45 = scalar_select %p42, %s43, %s44
      %p48 = pneg %p42
      %p49 = scmp.eq.s32.totalorder %s19, 1
      %p50 = por %p48, %p49
      %p51 = scmp.ne.s32.totalorder %s43, %s46
      %p52 = scmp.eq.s32.totalorder %s19, 0
      %p53 = por %p51, %p52
      %p54 = scmp.ne.s32.totalorder %s43, %s46
      %p55 = scmp.eq.s32.totalorder %s24, 1
      %p56 = por %p54, %p55
      %p57 = scmp.ne.s32.totalorder %s46, %s47
      %p58 = scmp.eq.s32.totalorder %s24, 0
      %p59 = por %p57, %p58
      %p60 = scmp.ne.s32.totalorder %s46, %s47
      %p61 = scmp.eq.s32.totalorder %s25, 1
      %p62 = por %p60, %p61
      %p64 = scmp.ne.s32.totalorder %s47, %s63
      %p65 = scmp.eq.s32.totalorder %s25, 0
      %p66 = por %p64, %p65
      %s68 = sadd.s32 %s67, 1
      %p71 = scmp.eq.s32.totalorder %s19, 1
      %p72 = scmp.ne.s32.totalorder %s67, %s69
      %p73 = scmp.eq.s32.totalorder %s19, 0
      %p74 = por %p72, %p73
      %p75 = scmp.ne.s32.totalorder %s67, %s69
      %p76 = scmp.eq.s32.totalorder %s24, 1
      %p77 = por %p75, %p76
      %p78 = scmp.ne.s32.totalorder %s69, %s70
      %p79 = scmp.eq.s32.totalorder %s24, 0
      %p80 = por %p78, %p79
      %p81 = scmp.ne.s32.totalorder %s69, %s70
      %p82 = scmp.eq.s32.totalorder %s25, 1
      %p83 = por %p81, %p82
      %p85 = scmp.ne.s32.totalorder %s70, %s84
      %p86 = scmp.eq.s32.totalorder %s25, 0
      %p87 = por %p85, %p86
      %s89 = sadd.s32 %s88, 1
      %p92 = scmp.eq.s32.totalorder %s19, 1
      %p93 = scmp.ne.s32.totalorder %s88, %s90
      %p94 = scmp.eq.s32.totalorder %s19, 0
      %p95 = por %p93, %p94
      %p96 = scmp.ne.s32.totalorder %s88, %s90
      %p97 = scmp.eq.s32.totalorder %s24, 1
      %p98 = por %p96, %p97
      %p99 = scmp.ne.s32.totalorder %s90, %s91
      %p100 = scmp.eq.s32.totalorder %s24, 0
      %p101 = por %p99, %p100
      %p102 = scmp.ne.s32.totalorder %s90, %s91
      %p103 = scmp.eq.s32.totalorder %s25, 1
      %p104 = por %p102, %p103
      %p106 = scmp.ne.s32.totalorder %s91, %s105
      %p107 = scmp.eq.s32.totalorder %s25, 0
      %p108 = por %p106, %p107
      %s110 = sadd.s32 %s109, 1
      %p113 = scmp.eq.s32.totalorder %s19, 1
      %p114 = scmp.ne.s32.totalorder %s109, %s111
      %p115 = scmp.eq.s32.totalorder %s19, 0
      %p116 = por %p114, %p115
      %p117 = scmp.ne.s32.totalorder %s109, %s111
      %p118 = scmp.eq.s32.totalorder %s24, 1
      %p119 = por %p117, %p118
      %p120 = scmp.ne.s32.totalorder %s111, %s112
      %p121 = scmp.eq.s32.totalorder %s24, 0
      %p122 = por %p120, %p121
      %p123 = scmp.ne.s32.totalorder %s111, %s112
      %p124 = scmp.eq.s32.totalorder %s25, 1
      %p125 = por %p123, %p124
      %p127 = scmp.ne.s32.totalorder %s112, %s126
      %p128 = scmp.eq.s32.totalorder %s25, 0
      %p129 = por %p127, %p128
      %s131 = sadd.s32 %s130, 1
      %p134 = scmp.eq.s32.totalorder %s19, 1
      %p135 = scmp.ne.s32.totalorder %s130, %s132
      %p136 = scmp.eq.s32.totalorder %s19, 0
      %p137 = por %p135, %p136
      %p138 = scmp.ne.s32.totalorder %s130, %s132
      %p139 = scmp.eq.s32.totalorder %s24, 1
      %p140 = por %p138, %p139
      %p141 = scmp.ne.s32.totalorder %s132, %s133
      %p142 = scmp.eq.s32.totalorder %s24, 0
      %p143 = por %p141, %p142
      %p144 = scmp.ne.s32.totalorder %s132, %s133
      %p145 = scmp.eq.s32.totalorder %s25, 1
      %p146 = por %p144, %p145
      %p148 = scmp.ne.s32.totalorder %s133, %s147
      %p149 = scmp.eq.s32.totalorder %s25, 0
      %p150 = por %p148, %p149
      %s151 = ssub.s32 %s26, %s38
      %p152 = scmp.eq.s32.totalorder %s151, 0
      %s154 = sadd.s32 %s153, 1
      %s155 = scalar_select %p152, %s153, %s154
      %p158 = pneg %p152
      %p159 = scmp.eq.s32.totalorder %s19, 1
      %p160 = por %p158, %p159
      %p161 = scmp.ne.s32.totalorder %s153, %s156
      %p162 = scmp.eq.s32.totalorder %s19, 0
      %p163 = por %p161, %p162
      %p164 = scmp.ne.s32.totalorder %s153, %s156
      %p165 = scmp.eq.s32.totalorder %s24, 1
      %p166 = por %p164, %p165
      %p167 = scmp.ne.s32.totalorder %s156, %s157
      %p168 = scmp.eq.s32.totalorder %s24, 0
      %p169 = por %p167, %p168
      %p170 = scmp.ne.s32.totalorder %s156, %s157
      %p171 = scmp.eq.s32.totalorder %s25, 1
      %p172 = por %p170, %p171
      %p174 = scmp.ne.s32.totalorder %s157, %s173
      %p175 = scmp.eq.s32.totalorder %s25, 0
      %p176 = por %p174, %p175
      %p177 = scmp.le.s32.totalorder 1, %s19
      %p178 = scmp.lt.s32.totalorder %s19, 3
      %p179 = pnand %p177, %p178
      %p180 = pneg %p179
      // Predicated region
      $region9: #{tpu_custom_call.1} parent=5 // pred_check
        _
      $region10: #{tpu_custom_call.1} parent=5 // pred_check_branch
        %182 = sbr.rel (%p179) target = $region12
      $region11: #{tpu_custom_call.1} parent=5 // pred_region
        %s183 = ssub.s32 %s19, 1
        // Predicated region
        $region13: #{tpu_custom_call.1} parent=11 // pred_check
          %p184 = pneg %p80
        $region14: #{tpu_custom_call.1} parent=11 // pred_check_branch
          %186 = sbr.rel (%p184) target = $region16
        $region15: #{tpu_custom_call.1} parent=11 // pred_region
          %s188 = ssub.s32 12288, 12288
          %189 = vsyncadd [#allocation7], %s188
          %s190 = sshll.u32 [#allocation6], 4
          %s191 = int_to_ptr.vmem [resolvable:$true] %s190
          %196 = dma.hbm_to_vmem [thread:$0]  %s1, 12288, %s191, [#allocation7], 512, 512, 32
        $region16: #{tpu_custom_call.1} parent=11 // pred_fallthru
          _
        // Predicated region
        $region17: #{tpu_custom_call.1} parent=11 // pred_check
          %p197 = pneg %p101
        $region18: #{tpu_custom_call.1} parent=11 // pred_check_branch
          %199 = sbr.rel (%p197) target = $region20
        $region19: #{tpu_custom_call.1} parent=11 // pred_region
          %s201 = ssub.s32 128, 128
          %202 = vsyncadd [#allocation7], %s201
          %s204 = sshll.u32 [#allocation8], 4
          %s205 = int_to_ptr.vmem [resolvable:$true] %s204
          %207 = dma.hbm_to_vmem [thread:$0]  %s2, 128, %s205, [#allocation7]
        $region20: #{tpu_custom_call.1} parent=11 // pred_fallthru
          _
        // Predicated region
        $region21: #{tpu_custom_call.1} parent=11 // pred_check
          %p208 = pneg %p122
        $region22: #{tpu_custom_call.1} parent=11 // pred_check_branch
          %210 = sbr.rel (%p208) target = $region24
        $region23: #{tpu_custom_call.1} parent=11 // pred_region
          %s212 = ssub.s32 8192, 8192
          %213 = vsyncadd [#allocation10], %s212
          %s214 = sshll.u32 [#allocation9], 4
          %s215 = int_to_ptr.vmem [resolvable:$true] %s214
          %220 = dma.hbm_to_vmem [thread:$0]  %s3, 8192, %s215, [#allocation10], 64, 64, 4
        $region24: #{tpu_custom_call.1} parent=11 // pred_fallthru
          _
        // Predicated region
        $region25: #{tpu_custom_call.1} parent=11 // pred_check
          %p221 = pneg %p143
        $region26: #{tpu_custom_call.1} parent=11 // pred_check_branch
          %223 = sbr.rel (%p221) target = $region28
        $region27: #{tpu_custom_call.1} parent=11 // pred_region
          _
        $region28: #{tpu_custom_call.1} parent=11 // pred_fallthru
          _
      $region12: #{tpu_custom_call.1} parent=5 // pred_fallthru
        _
      %p224 = scmp.lt.s32.totalorder %s19, 2
      // Predicated region
      $region29: #{tpu_custom_call.1} parent=5 // pred_check
        %p225 = pneg %p224
      $region30: #{tpu_custom_call.1} parent=5 // pred_check_branch
        %227 = sbr.rel (%p225) target = $region32
      $region31: #{tpu_custom_call.1} parent=5 // pred_region
        // Predicated region
        $region33: #{tpu_custom_call.1} parent=31 // pred_check
          %p228 = pneg %p53
        $region34: #{tpu_custom_call.1} parent=31 // pred_check_branch
          %230 = sbr.rel (%p228) target = $region36
        $region35: #{tpu_custom_call.1} parent=31 // pred_region
          %s231 = sand.u32 %s43, 1
          %s232 = scalar_lea.sflag [#allocation4], %s231
          %s233 = sand.u32 %s43, 1
          %s234 = smul.addr %s233, 4
          %s235 = scalar_lea.vmem [#allocation3], %s234
          %s237 = ssub.s32 64, 64
          %238 = vsyncadd %s232, %s237
          %s239 = smul.addr %s27, 2
          %s240 = smul.addr %s26, 2
          %s241 = sadd.s32 %s239, %s240
          %s242 = smul.addr %s241, 32
          %s243 = scalar_lea.hbm %s0, %s242
          %s245 = sshll.u32 %s235, 4
          %s246 = int_to_ptr.vmem [resolvable:$true] %s245
          %248 = dma.hbm_to_vmem [thread:$0]  %s243, 64, %s246, %s232
        $region36: #{tpu_custom_call.1} parent=31 // pred_fallthru
          _
      $region32: #{tpu_custom_call.1} parent=5 // pred_fallthru
        _
      %p249 = scmp.le.s32.totalorder 1, %s19
      %p250 = scmp.lt.s32.totalorder %s19, 3
      %p251 = pnand %p249, %p250
      %p252 = pneg %p251
      // Predicated region
      $region37: #{tpu_custom_call.1} parent=5 // pred_check
        _
      $region38: #{tpu_custom_call.1} parent=5 // pred_check_branch
        %254 = sbr.rel (%p251) target = $region40
      $region39: #{tpu_custom_call.1} parent=5 // pred_region
        %s255 = ssub.s32 %s19, 1
        %s256 = sand.u32 %s46, 1
        %s257 = scalar_lea.sflag [#allocation4], %s256
        %s258 = sand.u32 %s46, 1
        %s259 = smul.addr %s258, 4
        %s260 = scalar_lea.vmem [#allocation3], %s259
        // Predicated region
        $region41: #{tpu_custom_call.1} parent=39 // pred_check
          %p261 = pneg %p59
        $region42: #{tpu_custom_call.1} parent=39 // pred_check_branch
          %263 = sbr.rel (%p261) target = $region44
        $region43: #{tpu_custom_call.1} parent=39 // pred_region
          %264 = dma.done %s257, 64
        $region44: #{tpu_custom_call.1} parent=39 // pred_fallthru
          _
        // Predicated region
        $region45: #{tpu_custom_call.1} parent=39 // pred_check
          %p265 = pneg %p80
        $region46: #{tpu_custom_call.1} parent=39 // pred_check_branch
          %267 = sbr.rel (%p265) target = $region48
        $region47: #{tpu_custom_call.1} parent=39 // pred_region
          %268 = dma.done [#allocation7], 12288
        $region48: #{tpu_custom_call.1} parent=39 // pred_fallthru
          _
        // Predicated region
        $region49: #{tpu_custom_call.1} parent=39 // pred_check
          %p269 = pneg %p101
        $region50: #{tpu_custom_call.1} parent=39 // pred_check_branch
          %271 = sbr.rel (%p269) target = $region52
        $region51: #{tpu_custom_call.1} parent=39 // pred_region
          %272 = dma.done [#allocation7], 128
        $region52: #{tpu_custom_call.1} parent=39 // pred_fallthru
          _
        // Predicated region
        $region53: #{tpu_custom_call.1} parent=39 // pred_check
          %p273 = pneg %p122
        $region54: #{tpu_custom_call.1} parent=39 // pred_check_branch
          %275 = sbr.rel (%p273) target = $region56
        $region55: #{tpu_custom_call.1} parent=39 // pred_region
          %276 = dma.done [#allocation10], 8192
        $region56: #{tpu_custom_call.1} parent=39 // pred_fallthru
          _
        %s277 = sand.u32 %s46, 1
        %s278 = scalar_lea.sflag [#allocation4], %s277
        %s279 = sand.u32 %s46, 1
        %s280 = smul.addr %s279, 4
        %s281 = scalar_lea.vmem [#allocation3], %s280
        %p282 = pneg %p59
        %p283 = pneg %p56
        %p284 = pneg %p80
        %p285 = pneg %p77
        %p286 = pneg %p101
        %p287 = pneg %p98
        %p288 = pneg %p122
        %p289 = pneg %p119
        %p290 = pneg %p143
        %p291 = pneg %p140
        %p292 = pneg %p169
        %p293 = pneg %p166
        %s294 = sand.u32 %s156, 1
        %s295 = scalar_lea.sflag [#allocation5], %s294
        %s296 = sand.u32 %s156, 1
        %s297 = scalar_lea.vmem [#allocation11], %s296
        %p299 = scmp.eq.s32.totalorder %s29, 0
        // Predicated region
        $region57: #{tpu_custom_call.1} parent=39 // pred_check
          %p300 = pneg %p299
        $region58: #{tpu_custom_call.1} parent=39 // pred_check_branch
          %302 = sbr.rel (%p300) target = $region60
        $region59: #{tpu_custom_call.1} parent=39 // pred_region
          %v303 = vlaneseq
          %vm304 = vcmp.ge.s32.totalorder %v303, 0
          %vm305 = vcmp.lt.s32.totalorder %v303, 192
          %vm306 = vmand %vm304, %vm305
          %307 = vst.msk [vmem:[#allocation2] sm:$0x3] %vm306, 0.0
        $region60: #{tpu_custom_call.1} parent=39 // pred_fallthru
          _
        %v308 = vld [vmem:[#allocation2] sm:$0x3]
        %v309 = vld [vmem:[%s260] sm:$0xf]
        %v310 = vunpack.c.l.bf16 %v309
        %v312 = vcombine.high %v310, %v310
        %vm314 = vcmask 1043456
        %v315 = vsel %vm314, %v310, 0.0
        %v316 = vrot.slane %v315, 4
        %v317 = vadd.f32 %v315, %v316
        %v318 = vrot.slane %v317, 2
        %v319 = vadd.f32 %v317, %v318
        %v320 = vrot.slane %v319, 1
        %v321 = vadd.f32 %v319, %v320
        %vm322 = vcmask 519168
        %v323 = vsel %vm322, %v312, 0.0
        %v324 = vrot.slane %v323, 4
        %v325 = vadd.f32 %v323, %v324
        %v326 = vrot.slane %v325, 2
        %v327 = vadd.f32 %v325, %v326
        %v328 = vrot.slane %v327, 1
        %v329 = vadd.f32 %v327, %v328
        %v332 = vcombine.low %v321, %v329
        %v334 = vunpack.c.l.s4 1966171168
        %v335 = vunpack.c.0.s8 %v334
        %v336 = vlaneseq
        %v337 = vshrl.u32 %v336, 7
        %v338 = vsub.s32 %v335, %v337
        %v339 = vrot.slane %v332, %v338
        %v341 = vunpack.c.l.s4 1966171168
        %v342 = vunpack.c.0.s8 %v341
        %v343 = vlaneseq
        %v344 = vshrl.u32 %v343, 7
        %v345 = vsub.s32 %v342, %v344
        %v346 = vrot.slane %v339, %v345
        %v348 = vadd.f32 %v308, %v346
        %v349 = vlaneseq
        %vm350 = vcmp.ge.s32.totalorder %v349, 0
        %vm351 = vcmp.lt.s32.totalorder %v349, 192
        %vm352 = vmand %vm350, %vm351
        %353 = vst.msk [vmem:[#allocation2] sm:$0x3] %vm352, %v348
        // Predicated region
        $region61: #{tpu_custom_call.1} parent=39 // pred_check
          %p354 = pneg %p299
        $region62: #{tpu_custom_call.1} parent=39 // pred_check_branch
          %356 = sbr.rel (%p354) target = $region64
        $region63: #{tpu_custom_call.1} parent=39 // pred_region
          %v357 = vld [vmem:[#allocation2] sm:$0x3]
          %v358 = vmul.f32 %v357, 0.25
          %v360 = vlaneseq
          %v361 = vshrl.u32 %v360, 7
          %v362 = vsub.s32 0, %v361
          %v363 = vrot.slane %v358, %v362
          %v364 = vlaneseq
          %v365 = vshrl.u32 %v364, 7
          %v366 = vsub.s32 1, %v365
          %v367 = vrot.slane %v358, %v366
          %v370 = vpack.c.bf16 %v363, %v363
          %v371 = vpack.c.bf16 %v367, %v367
          %v372 = vld [vmem:[#allocation6] sm:$0xff]
          %v373 = vld [vmem:[#allocation6 + $0x8] sm:$0xff]
          %v374 = vld [vmem:[#allocation6 + $0x10] sm:$0xff]
          %v375 = vld [vmem:[#allocation6 + $0x18] sm:$0xff]
          %v376 = vld [vmem:[#allocation6 + $0x20] sm:$0xff]
          %v377 = vld [vmem:[#allocation6 + $0x28] sm:$0xff]
          %v378 = vld [vmem:[#allocation6 + $0x30] sm:$0xff]
          %v379 = vld [vmem:[#allocation6 + $0x38] sm:$0xff]
          %v380 = vld [vmem:[#allocation6 + $0x40] sm:$0xff]
          %v381 = vld [vmem:[#allocation6 + $0x48] sm:$0xff]
          %v382 = vld [vmem:[#allocation6 + $0x50] sm:$0xff]
          %v383 = vld [vmem:[#allocation6 + $0x58] sm:$0xff]
          %v384 = vld [vmem:[#allocation6 + $0x60] sm:$0xff]
          %v385 = vld [vmem:[#allocation6 + $0x68] sm:$0xff]
          %v386 = vld [vmem:[#allocation6 + $0x70] sm:$0xff]
          %v387 = vld [vmem:[#allocation6 + $0x78] sm:$0xff]
          %v388 = vld [vmem:[#allocation6 + $0x80] sm:$0xff]
          %v389 = vld [vmem:[#allocation6 + $0x88] sm:$0xff]
          %v390 = vld [vmem:[#allocation6 + $0x90] sm:$0xff]
          %v391 = vld [vmem:[#allocation6 + $0x98] sm:$0xff]
          %v392 = vld [vmem:[#allocation6 + $0xa0] sm:$0xff]
          %v393 = vld [vmem:[#allocation6 + $0xa8] sm:$0xff]
          %v394 = vld [vmem:[#allocation6 + $0xb0] sm:$0xff]
          %v395 = vld [vmem:[#allocation6 + $0xb8] sm:$0xff]
          %v396 = vld [vmem:[#allocation6 + $0xc0] sm:$0xff]
          %v397 = vld [vmem:[#allocation6 + $0xc8] sm:$0xff]
          %v398 = vld [vmem:[#allocation6 + $0xd0] sm:$0xff]
          %v399 = vld [vmem:[#allocation6 + $0xd8] sm:$0xff]
          %v400 = vld [vmem:[#allocation6 + $0xe0] sm:$0xff]
          %v401 = vld [vmem:[#allocation6 + $0xe8] sm:$0xff]
          %v402 = vld [vmem:[#allocation6 + $0xf0] sm:$0xff]
          %v403 = vld [vmem:[#allocation6 + $0xf8] sm:$0xff]
          %v404 = vld [vmem:[#allocation6 + $0x100] sm:$0xff]
          %v405 = vld [vmem:[#allocation6 + $0x108] sm:$0xff]
          %v406 = vld [vmem:[#allocation6 + $0x110] sm:$0xff]
          %v407 = vld [vmem:[#allocation6 + $0x118] sm:$0xff]
          %v408 = vld [vmem:[#allocation6 + $0x120] sm:$0xff]
          %v409 = vld [vmem:[#allocation6 + $0x128] sm:$0xff]
          %v410 = vld [vmem:[#allocation6 + $0x130] sm:$0xff]
          %v411 = vld [vmem:[#allocation6 + $0x138] sm:$0xff]
          %v412 = vld [vmem:[#allocation6 + $0x140] sm:$0xff]
          %v413 = vld [vmem:[#allocation6 + $0x148] sm:$0xff]
          %v414 = vld [vmem:[#allocation6 + $0x150] sm:$0xff]
          %v415 = vld [vmem:[#allocation6 + $0x158] sm:$0xff]
          %v416 = vld [vmem:[#allocation6 + $0x160] sm:$0xff]
          %v417 = vld [vmem:[#allocation6 + $0x168] sm:$0xff]
          %v418 = vld [vmem:[#allocation6 + $0x170] sm:$0xff]
          %v419 = vld [vmem:[#allocation6 + $0x178] sm:$0xff]
          %v420 = vld [vmem:[#allocation6 + $0x180] sm:$0xff]
          %v421 = vld [vmem:[#allocation6 + $0x188] sm:$0xff]
          %v422 = vld [vmem:[#allocation6 + $0x190] sm:$0xff]
          %v423 = vld [vmem:[#allocation6 + $0x198] sm:$0xff]
          %v424 = vld [vmem:[#allocation6 + $0x1a0] sm:$0xff]
          %v425 = vld [vmem:[#allocation6 + $0x1a8] sm:$0xff]
          %v426 = vld [vmem:[#allocation6 + $0x1b0] sm:$0xff]
          %v427 = vld [vmem:[#allocation6 + $0x1b8] sm:$0xff]
          %v428 = vld [vmem:[#allocation6 + $0x1c0] sm:$0xff]
          %v429 = vld [vmem:[#allocation6 + $0x1c8] sm:$0xff]
          %v430 = vld [vmem:[#allocation6 + $0x1d0] sm:$0xff]
          %v431 = vld [vmem:[#allocation6 + $0x1d8] sm:$0xff]
          %v432 = vld [vmem:[#allocation6 + $0x1e0] sm:$0xff]
          %v433 = vld [vmem:[#allocation6 + $0x1e8] sm:$0xff]
          %v434 = vld [vmem:[#allocation6 + $0x1f0] sm:$0xff]
          %v435 = vld [vmem:[#allocation6 + $0x1f8] sm:$0xff]
          %v436 = vld [vmem:[#allocation6 + $0x200] sm:$0xff]
          %v437 = vld [vmem:[#allocation6 + $0x208] sm:$0xff]
          %v438 = vld [vmem:[#allocation6 + $0x210] sm:$0xff]
          %v439 = vld [vmem:[#allocation6 + $0x218] sm:$0xff]
          %v440 = vld [vmem:[#allocation6 + $0x220] sm:$0xff]
          %v441 = vld [vmem:[#allocation6 + $0x228] sm:$0xff]
          %v442 = vld [vmem:[#allocation6 + $0x230] sm:$0xff]
          %v443 = vld [vmem:[#allocation6 + $0x238] sm:$0xff]
          %v444 = vld [vmem:[#allocation6 + $0x240] sm:$0xff]
          %v445 = vld [vmem:[#allocation6 + $0x248] sm:$0xff]
          %v446 = vld [vmem:[#allocation6 + $0x250] sm:$0xff]
          %v447 = vld [vmem:[#allocation6 + $0x258] sm:$0xff]
          %v448 = vld [vmem:[#allocation6 + $0x260] sm:$0xff]
          %v449 = vld [vmem:[#allocation6 + $0x268] sm:$0xff]
          %v450 = vld [vmem:[#allocation6 + $0x270] sm:$0xff]
          %v451 = vld [vmem:[#allocation6 + $0x278] sm:$0xff]
          %v452 = vld [vmem:[#allocation6 + $0x280] sm:$0xff]
          %v453 = vld [vmem:[#allocation6 + $0x288] sm:$0xff]
          %v454 = vld [vmem:[#allocation6 + $0x290] sm:$0xff]
          %v455 = vld [vmem:[#allocation6 + $0x298] sm:$0xff]
          %v456 = vld [vmem:[#allocation6 + $0x2a0] sm:$0xff]
          %v457 = vld [vmem:[#allocation6 + $0x2a8] sm:$0xff]
          %v458 = vld [vmem:[#allocation6 + $0x2b0] sm:$0xff]
          %v459 = vld [vmem:[#allocation6 + $0x2b8] sm:$0xff]
          %v460 = vld [vmem:[#allocation6 + $0x2c0] sm:$0xff]
          %v461 = vld [vmem:[#allocation6 + $0x2c8] sm:$0xff]
          %v462 = vld [vmem:[#allocation6 + $0x2d0] sm:$0xff]
          %v463 = vld [vmem:[#allocation6 + $0x2d8] sm:$0xff]
          %v464 = vld [vmem:[#allocation6 + $0x2e0] sm:$0xff]
          %v465 = vld [vmem:[#allocation6 + $0x2e8] sm:$0xff]
          %v466 = vld [vmem:[#allocation6 + $0x2f0] sm:$0xff]
          %v467 = vld [vmem:[#allocation6 + $0x2f8] sm:$0xff]
          %v468 = vld [vmem:[#allocation8] sm:$0xff]
          %v565 = vunpack.c.l.b16 %v372
          %v566 = vunpack.c.h.b16 %v372
          %v567 = vunpack.c.l.b16 %v373
          %v568 = vunpack.c.h.b16 %v373
          %v569 = vunpack.c.l.b16 %v374
          %v570 = vunpack.c.h.b16 %v374
          %v571 = vunpack.c.l.b16 %v375
          %v572 = vunpack.c.h.b16 %v375
          %v573 = vunpack.c.l.b16 %v376
          %v574 = vunpack.c.h.b16 %v376
          %v575 = vunpack.c.l.b16 %v377
          %v576 = vunpack.c.h.b16 %v377
          %v577 = vunpack.c.l.b16 %v378
          %v578 = vunpack.c.h.b16 %v378
          %v579 = vunpack.c.l.b16 %v379
          %v580 = vunpack.c.h.b16 %v379
          %v581 = vunpack.c.l.b16 %v380
          %v582 = vunpack.c.h.b16 %v380
          %v583 = vunpack.c.l.b16 %v381
          %v584 = vunpack.c.h.b16 %v381
          %v585 = vunpack.c.l.b16 %v382
          %v586 = vunpack.c.h.b16 %v382
          %v587 = vunpack.c.l.b16 %v383
          %v588 = vunpack.c.h.b16 %v383
          %v589 = vunpack.c.l.b16 %v384
          %v590 = vunpack.c.h.b16 %v384
          %v591 = vunpack.c.l.b16 %v385
          %v592 = vunpack.c.h.b16 %v385
          %v593 = vunpack.c.l.b16 %v386
          %v594 = vunpack.c.h.b16 %v386
          %v595 = vunpack.c.l.b16 %v387
          %v596 = vunpack.c.h.b16 %v387
          %v597 = vunpack.c.l.b16 %v388
          %v598 = vunpack.c.h.b16 %v388
          %v599 = vunpack.c.l.b16 %v389
          %v600 = vunpack.c.h.b16 %v389
          %v601 = vunpack.c.l.b16 %v390
          %v602 = vunpack.c.h.b16 %v390
          %v603 = vunpack.c.l.b16 %v391
          %v604 = vunpack.c.h.b16 %v391
          %v605 = vunpack.c.l.b16 %v392
          %v606 = vunpack.c.h.b16 %v392
          %v607 = vunpack.c.l.b16 %v393
          %v608 = vunpack.c.h.b16 %v393
          %v609 = vunpack.c.l.b16 %v394
          %v610 = vunpack.c.h.b16 %v394
          %v611 = vunpack.c.l.b16 %v395
          %v612 = vunpack.c.h.b16 %v395
          %v613 = vunpack.c.l.b16 %v396
          %v614 = vunpack.c.h.b16 %v396
          %v615 = vunpack.c.l.b16 %v397
          %v616 = vunpack.c.h.b16 %v397
          %v617 = vunpack.c.l.b16 %v398
          %v618 = vunpack.c.h.b16 %v398
          %v619 = vunpack.c.l.b16 %v399
          %v620 = vunpack.c.h.b16 %v399
          %v621 = vunpack.c.l.b16 %v400
          %v622 = vunpack.c.h.b16 %v400
          %v623 = vunpack.c.l.b16 %v401
          %v624 = vunpack.c.h.b16 %v401
          %v625 = vunpack.c.l.b16 %v402
          %v626 = vunpack.c.h.b16 %v402
          %v627 = vunpack.c.l.b16 %v403
          %v628 = vunpack.c.h.b16 %v403
          %v629 = vunpack.c.l.b16 %v404
          %v630 = vunpack.c.h.b16 %v404
          %v631 = vunpack.c.l.b16 %v405
          %v632 = vunpack.c.h.b16 %v405
          %v633 = vunpack.c.l.b16 %v406
          %v634 = vunpack.c.h.b16 %v406
          %v635 = vunpack.c.l.b16 %v407
          %v636 = vunpack.c.h.b16 %v407
          %v637 = vunpack.c.l.b16 %v408
          %v638 = vunpack.c.h.b16 %v408
          %v639 = vunpack.c.l.b16 %v409
          %v640 = vunpack.c.h.b16 %v409
          %v641 = vunpack.c.l.b16 %v410
          %v642 = vunpack.c.h.b16 %v410
          %v643 = vunpack.c.l.b16 %v411
          %v644 = vunpack.c.h.b16 %v411
          %v645 = vunpack.c.l.b16 %v412
          %v646 = vunpack.c.h.b16 %v412
          %v647 = vunpack.c.l.b16 %v413
          %v648 = vunpack.c.h.b16 %v413
          %v649 = vunpack.c.l.b16 %v414
          %v650 = vunpack.c.h.b16 %v414
          %v651 = vunpack.c.l.b16 %v415
          %v652 = vunpack.c.h.b16 %v415
          %v653 = vunpack.c.l.b16 %v416
          %v654 = vunpack.c.h.b16 %v416
          %v655 = vunpack.c.l.b16 %v417
          %v656 = vunpack.c.h.b16 %v417
          %v657 = vunpack.c.l.b16 %v418
          %v658 = vunpack.c.h.b16 %v418
          %v659 = vunpack.c.l.b16 %v419
          %v660 = vunpack.c.h.b16 %v419
          %v661 = vunpack.c.l.b16 %v420
          %v662 = vunpack.c.h.b16 %v420
          %v663 = vunpack.c.l.b16 %v421
          %v664 = vunpack.c.h.b16 %v421
          %v665 = vunpack.c.l.b16 %v422
          %v666 = vunpack.c.h.b16 %v422
          %v667 = vunpack.c.l.b16 %v423
          %v668 = vunpack.c.h.b16 %v423
          %v669 = vunpack.c.l.b16 %v424
          %v670 = vunpack.c.h.b16 %v424
          %v671 = vunpack.c.l.b16 %v425
          %v672 = vunpack.c.h.b16 %v425
          %v673 = vunpack.c.l.b16 %v426
          %v674 = vunpack.c.h.b16 %v426
          %v675 = vunpack.c.l.b16 %v427
          %v676 = vunpack.c.h.b16 %v427
          %v677 = vunpack.c.l.b16 %v428
          %v678 = vunpack.c.h.b16 %v428
          %v679 = vunpack.c.l.b16 %v429
          %v680 = vunpack.c.h.b16 %v429
          %v681 = vunpack.c.l.b16 %v430
          %v682 = vunpack.c.h.b16 %v430
          %v683 = vunpack.c.l.b16 %v431
          %v684 = vunpack.c.h.b16 %v431
          %v685 = vunpack.c.l.b16 %v432
          %v686 = vunpack.c.h.b16 %v432
          %v687 = vunpack.c.l.b16 %v433
          %v688 = vunpack.c.h.b16 %v433
          %v689 = vunpack.c.l.b16 %v434
          %v690 = vunpack.c.h.b16 %v434
          %v691 = vunpack.c.l.b16 %v435
          %v692 = vunpack.c.h.b16 %v435
          %v693 = vunpack.c.l.b16 %v436
          %v694 = vunpack.c.h.b16 %v436
          %v695 = vunpack.c.l.b16 %v437
          %v696 = vunpack.c.h.b16 %v437
          %v697 = vunpack.c.l.b16 %v438
          %v698 = vunpack.c.h.b16 %v438
          %v699 = vunpack.c.l.b16 %v439
          %v700 = vunpack.c.h.b16 %v439
          %v701 = vunpack.c.l.b16 %v440
          %v702 = vunpack.c.h.b16 %v440
          %v703 = vunpack.c.l.b16 %v441
          %v704 = vunpack.c.h.b16 %v441
          %v705 = vunpack.c.l.b16 %v442
          %v706 = vunpack.c.h.b16 %v442
          %v707 = vunpack.c.l.b16 %v443
          %v708 = vunpack.c.h.b16 %v443
          %v709 = vunpack.c.l.b16 %v444
          %v710 = vunpack.c.h.b16 %v444
          %v711 = vunpack.c.l.b16 %v445
          %v712 = vunpack.c.h.b16 %v445
          %v713 = vunpack.c.l.b16 %v446
          %v714 = vunpack.c.h.b16 %v446
          %v715 = vunpack.c.l.b16 %v447
          %v716 = vunpack.c.h.b16 %v447
          %v717 = vunpack.c.l.b16 %v448
          %v718 = vunpack.c.h.b16 %v448
          %v719 = vunpack.c.l.b16 %v449
          %v720 = vunpack.c.h.b16 %v449
          %v721 = vunpack.c.l.b16 %v450
          %v722 = vunpack.c.h.b16 %v450
          %v723 = vunpack.c.l.b16 %v451
          %v724 = vunpack.c.h.b16 %v451
          %v725 = vunpack.c.l.b16 %v452
          %v726 = vunpack.c.h.b16 %v452
          %v727 = vunpack.c.l.b16 %v453
          %v728 = vunpack.c.h.b16 %v453
          %v729 = vunpack.c.l.b16 %v454
          %v730 = vunpack.c.h.b16 %v454
          %v731 = vunpack.c.l.b16 %v455
          %v732 = vunpack.c.h.b16 %v455
          %v733 = vunpack.c.l.b16 %v456
          %v734 = vunpack.c.h.b16 %v456
          %v735 = vunpack.c.l.b16 %v457
          %v736 = vunpack.c.h.b16 %v457
          %v737 = vunpack.c.l.b16 %v458
          %v738 = vunpack.c.h.b16 %v458
          %v739 = vunpack.c.l.b16 %v459
          %v740 = vunpack.c.h.b16 %v459
          %v741 = vunpack.c.l.b16 %v460
          %v742 = vunpack.c.h.b16 %v460
          %v743 = vunpack.c.l.b16 %v461
          %v744 = vunpack.c.h.b16 %v461
          %v745 = vunpack.c.l.b16 %v462
          %v746 = vunpack.c.h.b16 %v462
          %v747 = vunpack.c.l.b16 %v463
          %v748 = vunpack.c.h.b16 %v463
          %v749 = vunpack.c.l.b16 %v464
          %v750 = vunpack.c.h.b16 %v464
          %v751 = vunpack.c.l.b16 %v465
          %v752 = vunpack.c.h.b16 %v465
          %v753 = vunpack.c.l.b16 %v466
          %v754 = vunpack.c.h.b16 %v466
          %v755 = vunpack.c.l.b16 %v467
          %v756 = vunpack.c.h.b16 %v467
          %v757 = vpack.c.b16 %v573, %v565
          %v758 = vpack.c.b16 %v574, %v566
          %v759 = vpack.c.b16 %v575, %v567
          %v760 = vpack.c.b16 %v576, %v568
          %v761 = vpack.c.b16 %v577, %v569
          %v762 = vpack.c.b16 %v578, %v570
          %v763 = vpack.c.b16 %v579, %v571
          %v764 = vpack.c.b16 %v580, %v572
          %v765 = vpack.c.b16 %v589, %v581
          %v766 = vpack.c.b16 %v590, %v582
          %v767 = vpack.c.b16 %v591, %v583
          %v768 = vpack.c.b16 %v592, %v584
          %v769 = vpack.c.b16 %v593, %v585
          %v770 = vpack.c.b16 %v594, %v586
          %v771 = vpack.c.b16 %v595, %v587
          %v772 = vpack.c.b16 %v596, %v588
          %v773 = vpack.c.b16 %v605, %v597
          %v774 = vpack.c.b16 %v606, %v598
          %v775 = vpack.c.b16 %v607, %v599
          %v776 = vpack.c.b16 %v608, %v600
          %v777 = vpack.c.b16 %v609, %v601
          %v778 = vpack.c.b16 %v610, %v602
          %v779 = vpack.c.b16 %v611, %v603
          %v780 = vpack.c.b16 %v612, %v604
          %v781 = vpack.c.b16 %v621, %v613
          %v782 = vpack.c.b16 %v622, %v614
          %v783 = vpack.c.b16 %v623, %v615
          %v784 = vpack.c.b16 %v624, %v616
          %v785 = vpack.c.b16 %v625, %v617
          %v786 = vpack.c.b16 %v626, %v618
          %v787 = vpack.c.b16 %v627, %v619
          %v788 = vpack.c.b16 %v628, %v620
          %v789 = vpack.c.b16 %v637, %v629
          %v790 = vpack.c.b16 %v638, %v630
          %v791 = vpack.c.b16 %v639, %v631
          %v792 = vpack.c.b16 %v640, %v632
          %v793 = vpack.c.b16 %v641, %v633
          %v794 = vpack.c.b16 %v642, %v634
          %v795 = vpack.c.b16 %v643, %v635
          %v796 = vpack.c.b16 %v644, %v636
          %v797 = vpack.c.b16 %v653, %v645
          %v798 = vpack.c.b16 %v654, %v646
          %v799 = vpack.c.b16 %v655, %v647
          %v800 = vpack.c.b16 %v656, %v648
          %v801 = vpack.c.b16 %v657, %v649
          %v802 = vpack.c.b16 %v658, %v650
          %v803 = vpack.c.b16 %v659, %v651
          %v804 = vpack.c.b16 %v660, %v652
          %v805 = vpack.c.b16 %v669, %v661
          %v806 = vpack.c.b16 %v670, %v662
          %v807 = vpack.c.b16 %v671, %v663
          %v808 = vpack.c.b16 %v672, %v664
          %v809 = vpack.c.b16 %v673, %v665
          %v810 = vpack.c.b16 %v674, %v666
          %v811 = vpack.c.b16 %v675, %v667
          %v812 = vpack.c.b16 %v676, %v668
          %v813 = vpack.c.b16 %v685, %v677
          %v814 = vpack.c.b16 %v686, %v678
          %v815 = vpack.c.b16 %v687, %v679
          %v816 = vpack.c.b16 %v688, %v680
          %v817 = vpack.c.b16 %v689, %v681
          %v818 = vpack.c.b16 %v690, %v682
          %v819 = vpack.c.b16 %v691, %v683
          %v820 = vpack.c.b16 %v692, %v684
          %v821 = vpack.c.b16 %v701, %v693
          %v822 = vpack.c.b16 %v702, %v694
          %v823 = vpack.c.b16 %v703, %v695
          %v824 = vpack.c.b16 %v704, %v696
          %v825 = vpack.c.b16 %v705, %v697
          %v826 = vpack.c.b16 %v706, %v698
          %v827 = vpack.c.b16 %v707, %v699
          %v828 = vpack.c.b16 %v708, %v700
          %v829 = vpack.c.b16 %v717, %v709
          %v830 = vpack.c.b16 %v718, %v710
          %v831 = vpack.c.b16 %v719, %v711
          %v832 = vpack.c.b16 %v720, %v712
          %v833 = vpack.c.b16 %v721, %v713
          %v834 = vpack.c.b16 %v722, %v714
          %v835 = vpack.c.b16 %v723, %v715
          %v836 = vpack.c.b16 %v724, %v716
          %v837 = vpack.c.b16 %v733, %v725
          %v838 = vpack.c.b16 %v734, %v726
          %v839 = vpack.c.b16 %v735, %v727
          %v840 = vpack.c.b16 %v736, %v728
          %v841 = vpack.c.b16 %v737, %v729
          %v842 = vpack.c.b16 %v738, %v730
          %v843 = vpack.c.b16 %v739, %v731
          %v844 = vpack.c.b16 %v740, %v732
          %v845 = vpack.c.b16 %v749, %v741
          %v846 = vpack.c.b16 %v750, %v742
          %v847 = vpack.c.b16 %v751, %v743
          %v848 = vpack.c.b16 %v752, %v744
          %v849 = vpack.c.b16 %v753, %v745
          %v850 = vpack.c.b16 %v754, %v746
          %v851 = vpack.c.b16 %v755, %v747
          %v852 = vpack.c.b16 %v756, %v748
          %v950 = vlaneseq
          %v951 = vshrl.u32 %v950, 7
          %v952 = vsub.s32 0, %v951
          %v953 = vrot.slane %v468, %v952
          %v954 = vlaneseq
          %v955 = vshrl.u32 %v954, 7
          %v956 = vsub.s32 1, %v955
          %v957 = vrot.slane %v468, %v956
          %v958 = vlaneseq
          %v959 = vshrl.u32 %v958, 7
          %v960 = vsub.s32 2, %v959
          %v961 = vrot.slane %v468, %v960
          %v962 = vlaneseq
          %v963 = vshrl.u32 %v962, 7
          %v964 = vsub.s32 3, %v963
          %v965 = vrot.slane %v468, %v964
          %v966 = vlaneseq
          %v967 = vshrl.u32 %v966, 7
          %v968 = vsub.s32 4, %v967
          %v969 = vrot.slane %v468, %v968
          %v970 = vlaneseq
          %v971 = vshrl.u32 %v970, 7
          %v972 = vsub.s32 5, %v971
          %v973 = vrot.slane %v468, %v972
          %v974 = vlaneseq
          %v975 = vshrl.u32 %v974, 7
          %v976 = vsub.s32 6, %v975
          %v977 = vrot.slane %v468, %v976
          %v978 = vlaneseq
          %v979 = vshrl.u32 %v978, 7
          %v980 = vsub.s32 7, %v979
          %v981 = vrot.slane %v468, %v980
          %vm990 = vcmask 523264
          %v992 = vsel %vm990, %v371, 0
          %994 = vmatprep.subr.bf16.mxu0 %v758
          %995 = vmatpush1.bf16.msra.mxu0 %v757
          %996 = vmatprep.subr.bf16.mxu0 %v766
          %997 = vmatpush1.bf16.msra.mxu0 %v765
          %998 = vmatprep.subr.bf16.mxu0 %v774
          %999 = vmatpush1.bf16.msra.mxu0 %v773
          %1000 = vmatprep.subr.bf16.mxu0 %v782
          %1001 = vmatpush1.bf16.msra.mxu0 %v781
          %1002 = vmatprep.subr.bf16.mxu0 %v790
          %1003 = vmatpush1.bf16.msra.mxu0 %v789
          %1004 = vmatprep.subr.bf16.mxu0 %v798
          %1005 = vmatpush1.bf16.msra.mxu0 %v797
          %1006 = vmatprep.subr.bf16.mxu0 %v806
          %1007 = vmatpush1.bf16.msra.mxu0 %v805
          %1008 = vmatprep.subr.bf16.mxu0 %v814
          %1009 = vmatpush1.bf16.msra.mxu0 %v813
          %1010 = vmatprep.subr.bf16.mxu0 %v822
          %1011 = vmatpush1.bf16.msra.mxu0 %v821
          %1012 = vmatprep.subr.bf16.mxu0 %v830
          %1013 = vmatpush1.bf16.msra.mxu0 %v829
          %1014 = vmatprep.subr.bf16.mxu0 %v838
          %1015 = vmatpush1.bf16.msra.mxu0 %v837
          %1016 = vmatprep.subr.bf16.mxu0 %v846
          %1017 = vmatpush1.bf16.msra.mxu0 %v845
          %1018 = vmatprep.subr.bf16.mxu0 0
          %1019 = vmatpush1.bf16.msra.mxu0 0
          %1020 = vmatprep.subr.bf16.mxu0 0
          %1021 = vmatpush1.bf16.msra.mxu0 0
          %1022 = vmatprep.subr.bf16.mxu0 0
          %1023 = vmatpush1.bf16.msra.mxu0 0
          %1024 = vmatprep.subr.bf16.mxu0 0
          %1025 = vmatpush1.bf16.msra.mxu0 0
          %1026 = vmatprep.mubr.bf16.mxu0 %v992
          %1027 = vmatmul.mubr.bf16.gmra.mrb[0].mxu0 %v370
          %v1028 = vpop.f32.mrb[0].mxu0
          %v1029 = vadd.f32 %v953, %v1028
          %v1030 = vpop.f32.mrb[0].mxu0
          %v1031 = vadd.f32 %v957, %v1030
          %v1032 = vpop.f32.mrb[0].mxu0
          %v1033 = vpop.f32.mrb[0].mxu0
          %1034 = vdwg.mxu0
          %1035 = vmatprep.subr.bf16.mxu0 %v760
          %1036 = vmatpush1.bf16.msra.mxu0 %v759
          %1037 = vmatprep.subr.bf16.mxu0 %v768
          %1038 = vmatpush1.bf16.msra.mxu0 %v767
          %1039 = vmatprep.subr.bf16.mxu0 %v776
          %1040 = vmatpush1.bf16.msra.mxu0 %v775
          %1041 = vmatprep.subr.bf16.mxu0 %v784
          %1042 = vmatpush1.bf16.msra.mxu0 %v783
          %1043 = vmatprep.subr.bf16.mxu0 %v792
          %1044 = vmatpush1.bf16.msra.mxu0 %v791
          %1045 = vmatprep.subr.bf16.mxu0 %v800
          %1046 = vmatpush1.bf16.msra.mxu0 %v799
          %1047 = vmatprep.subr.bf16.mxu0 %v808
          %1048 = vmatpush1.bf16.msra.mxu0 %v807
          %1049 = vmatprep.subr.bf16.mxu0 %v816
          %1050 = vmatpush1.bf16.msra.mxu0 %v815
          %1051 = vmatprep.subr.bf16.mxu0 %v824
          %1052 = vmatpush1.bf16.msra.mxu0 %v823
          %1053 = vmatprep.subr.bf16.mxu0 %v832
          %1054 = vmatpush1.bf16.msra.mxu0 %v831
          %1055 = vmatprep.subr.bf16.mxu0 %v840
          %1056 = vmatpush1.bf16.msra.mxu0 %v839
          %1057 = vmatprep.subr.bf16.mxu0 %v848
          %1058 = vmatpush1.bf16.msra.mxu0 %v847
          %1059 = vmatprep.subr.bf16.mxu0 0
          %1060 = vmatpush1.bf16.msra.mxu0 0
          %1061 = vmatprep.subr.bf16.mxu0 0
          %1062 = vmatpush1.bf16.msra.mxu0 0
          %1063 = vmatprep.subr.bf16.mxu0 0
          %1064 = vmatpush1.bf16.msra.mxu0 0
          %1065 = vmatprep.subr.bf16.mxu0 0
          %1066 = vmatpush1.bf16.msra.mxu0 0
          %1067 = vmatprep.mubr.bf16.mxu0 %v992
          %1068 = vmatmul.mubr.bf16.gmra.mrb[0].mxu0 %v370
          %v1069 = vpop.f32.mrb[0].mxu0
          %v1070 = vadd.f32 %v961, %v1069
          %v1071 = vpop.f32.mrb[0].mxu0
          %v1072 = vadd.f32 %v965, %v1071
          %v1073 = vpop.f32.mrb[0].mxu0
          %v1074 = vpop.f32.mrb[0].mxu0
          %1075 = vdwg.mxu0
          %1076 = vmatprep.subr.bf16.mxu0 %v762
          %1077 = vmatpush1.bf16.msra.mxu0 %v761
          %1078 = vmatprep.subr.bf16.mxu0 %v770
          %1079 = vmatpush1.bf16.msra.mxu0 %v769
          %1080 = vmatprep.subr.bf16.mxu0 %v778
          %1081 = vmatpush1.bf16.msra.mxu0 %v777
          %1082 = vmatprep.subr.bf16.mxu0 %v786
          %1083 = vmatpush1.bf16.msra.mxu0 %v785
          %1084 = vmatprep.subr.bf16.mxu0 %v794
          %1085 = vmatpush1.bf16.msra.mxu0 %v793
          %1086 = vmatprep.subr.bf16.mxu0 %v802
          %1087 = vmatpush1.bf16.msra.mxu0 %v801
          %1088 = vmatprep.subr.bf16.mxu0 %v810
          %1089 = vmatpush1.bf16.msra.mxu0 %v809
          %1090 = vmatprep.subr.bf16.mxu0 %v818
          %1091 = vmatpush1.bf16.msra.mxu0 %v817
          %1092 = vmatprep.subr.bf16.mxu0 %v826
          %1093 = vmatpush1.bf16.msra.mxu0 %v825
          %1094 = vmatprep.subr.bf16.mxu0 %v834
          %1095 = vmatpush1.bf16.msra.mxu0 %v833
          %1096 = vmatprep.subr.bf16.mxu0 %v842
          %1097 = vmatpush1.bf16.msra.mxu0 %v841
          %1098 = vmatprep.subr.bf16.mxu0 %v850
          %1099 = vmatpush1.bf16.msra.mxu0 %v849
          %1100 = vmatprep.subr.bf16.mxu0 0
          %1101 = vmatpush1.bf16.msra.mxu0 0
          %1102 = vmatprep.subr.bf16.mxu0 0
          %1103 = vmatpush1.bf16.msra.mxu0 0
          %1104 = vmatprep.subr.bf16.mxu0 0
          %1105 = vmatpush1.bf16.msra.mxu0 0
          %1106 = vmatprep.subr.bf16.mxu0 0
          %1107 = vmatpush1.bf16.msra.mxu0 0
          %1108 = vmatprep.mubr.bf16.mxu0 %v992
          %1109 = vmatmul.mubr.bf16.gmra.mrb[0].mxu0 %v370
          %v1110 = vpop.f32.mrb[0].mxu0
          %v1111 = vadd.f32 %v969, %v1110
          %v1112 = vpop.f32.mrb[0].mxu0
          %v1113 = vadd.f32 %v973, %v1112
          %v1114 = vpop.f32.mrb[0].mxu0
          %v1115 = vpop.f32.mrb[0].mxu0
          %1116 = vdwg.mxu0
          %1117 = vmatprep.subr.bf16.mxu0 %v764
          %1118 = vmatpush1.bf16.msra.mxu0 %v763
          %1119 = vmatprep.subr.bf16.mxu0 %v772
          %1120 = vmatpush1.bf16.msra.mxu0 %v771
          %1121 = vmatprep.subr.bf16.mxu0 %v780
          %1122 = vmatpush1.bf16.msra.mxu0 %v779
          %1123 = vmatprep.subr.bf16.mxu0 %v788
          %1124 = vmatpush1.bf16.msra.mxu0 %v787
          %1125 = vmatprep.subr.bf16.mxu0 %v796
          %1126 = vmatpush1.bf16.msra.mxu0 %v795
          %1127 = vmatprep.subr.bf16.mxu0 %v804
          %1128 = vmatpush1.bf16.msra.mxu0 %v803
          %1129 = vmatprep.subr.bf16.mxu0 %v812
          %1130 = vmatpush1.bf16.msra.mxu0 %v811
          %1131 = vmatprep.subr.bf16.mxu0 %v820
          %1132 = vmatpush1.bf16.msra.mxu0 %v819
          %1133 = vmatprep.subr.bf16.mxu0 %v828
          %1134 = vmatpush1.bf16.msra.mxu0 %v827
          %1135 = vmatprep.subr.bf16.mxu0 %v836
          %1136 = vmatpush1.bf16.msra.mxu0 %v835
          %1137 = vmatprep.subr.bf16.mxu0 %v844
          %1138 = vmatpush1.bf16.msra.mxu0 %v843
          %1139 = vmatprep.subr.bf16.mxu0 %v852
          %1140 = vmatpush1.bf16.msra.mxu0 %v851
          %1141 = vmatprep.subr.bf16.mxu0 0
          %1142 = vmatpush1.bf16.msra.mxu0 0
          %1143 = vmatprep.subr.bf16.mxu0 0
          %1144 = vmatpush1.bf16.msra.mxu0 0
          %1145 = vmatprep.subr.bf16.mxu0 0
          %1146 = vmatpush1.bf16.msra.mxu0 0
          %1147 = vmatprep.subr.bf16.mxu0 0
          %1148 = vmatpush1.bf16.msra.mxu0 0
          %1149 = vmatprep.mubr.bf16.mxu0 %v992
          %1150 = vmatmul.mubr.bf16.gmra.mrb[0].mxu0 %v370
          %v1151 = vpop.f32.mrb[0].mxu0
          %v1152 = vadd.f32 %v977, %v1151
          %v1153 = vpop.f32.mrb[0].mxu0
          %v1154 = vadd.f32 %v981, %v1153
          %v1155 = vpop.f32.mrb[0].mxu0
          %v1156 = vpop.f32.mrb[0].mxu0
          %1157 = vdwg.mxu0
          %v1158 = vpack.c.bf16 %v1029, %v1029
          %v1159 = vpack.c.bf16 %v1031, %v1031
          %v1160 = vpack.c.bf16 %v1070, %v1070
          %v1161 = vpack.c.bf16 %v1072, %v1072
          %v1162 = vpack.c.bf16 %v1111, %v1111
          %v1163 = vpack.c.bf16 %v1113, %v1113
          %v1164 = vpack.c.bf16 %v1152, %v1152
          %v1165 = vpack.c.bf16 %v1154, %v1154
          %v1166 = vld [vmem:[#allocation9] sm:$0xf]
          %v1167 = vld [vmem:[#allocation9 + $0x4] sm:$0xf]
          %v1168 = vld [vmem:[#allocation9 + $0x8] sm:$0xf]
          %v1169 = vld [vmem:[#allocation9 + $0xc] sm:$0xf]
          %v1170 = vld [vmem:[#allocation9 + $0x10] sm:$0xf]
          %v1171 = vld [vmem:[#allocation9 + $0x14] sm:$0xf]
          %v1172 = vld [vmem:[#allocation9 + $0x18] sm:$0xf]
          %v1173 = vld [vmem:[#allocation9 + $0x1c] sm:$0xf]
          %v1174 = vld [vmem:[#allocation9 + $0x20] sm:$0xf]
          %v1175 = vld [vmem:[#allocation9 + $0x24] sm:$0xf]
          %v1176 = vld [vmem:[#allocation9 + $0x28] sm:$0xf]
          %v1177 = vld [vmem:[#allocation9 + $0x2c] sm:$0xf]
          %v1178 = vld [vmem:[#allocation9 + $0x30] sm:$0xf]
          %v1179 = vld [vmem:[#allocation9 + $0x34] sm:$0xf]
          %v1180 = vld [vmem:[#allocation9 + $0x38] sm:$0xf]
          %v1181 = vld [vmem:[#allocation9 + $0x3c] sm:$0xf]
          %v1182 = vld [vmem:[#allocation9 + $0x40] sm:$0xf]
          %v1183 = vld [vmem:[#allocation9 + $0x44] sm:$0xf]
          %v1184 = vld [vmem:[#allocation9 + $0x48] sm:$0xf]
          %v1185 = vld [vmem:[#allocation9 + $0x4c] sm:$0xf]
          %v1186 = vld [vmem:[#allocation9 + $0x50] sm:$0xf]
          %v1187 = vld [vmem:[#allocation9 + $0x54] sm:$0xf]
          %v1188 = vld [vmem:[#allocation9 + $0x58] sm:$0xf]
          %v1189 = vld [vmem:[#allocation9 + $0x5c] sm:$0xf]
          %v1190 = vld [vmem:[#allocation9 + $0x60] sm:$0xf]
          %v1191 = vld [vmem:[#allocation9 + $0x64] sm:$0xf]
          %v1192 = vld [vmem:[#allocation9 + $0x68] sm:$0xf]
          %v1193 = vld [vmem:[#allocation9 + $0x6c] sm:$0xf]
          %v1194 = vld [vmem:[#allocation9 + $0x70] sm:$0xf]
          %v1195 = vld [vmem:[#allocation9 + $0x74] sm:$0xf]
          %v1196 = vld [vmem:[#allocation9 + $0x78] sm:$0xf]
          %v1197 = vld [vmem:[#allocation9 + $0x7c] sm:$0xf]
          %v1198 = vld [vmem:[#allocation9 + $0x80] sm:$0xf]
          %v1199 = vld [vmem:[#allocation9 + $0x84] sm:$0xf]
          %v1200 = vld [vmem:[#allocation9 + $0x88] sm:$0xf]
          %v1201 = vld [vmem:[#allocation9 + $0x8c] sm:$0xf]
          %v1202 = vld [vmem:[#allocation9 + $0x90] sm:$0xf]
          %v1203 = vld [vmem:[#allocation9 + $0x94] sm:$0xf]
          %v1204 = vld [vmem:[#allocation9 + $0x98] sm:$0xf]
          %v1205 = vld [vmem:[#allocation9 + $0x9c] sm:$0xf]
          %v1206 = vld [vmem:[#allocation9 + $0xa0] sm:$0xf]
          %v1207 = vld [vmem:[#allocation9 + $0xa4] sm:$0xf]
          %v1208 = vld [vmem:[#allocation9 + $0xa8] sm:$0xf]
          %v1209 = vld [vmem:[#allocation9 + $0xac] sm:$0xf]
          %v1210 = vld [vmem:[#allocation9 + $0xb0] sm:$0xf]
          %v1211 = vld [vmem:[#allocation9 + $0xb4] sm:$0xf]
          %v1212 = vld [vmem:[#allocation9 + $0xb8] sm:$0xf]
          %v1213 = vld [vmem:[#allocation9 + $0xbc] sm:$0xf]
          %v1214 = vld [vmem:[#allocation9 + $0xc0] sm:$0xf]
          %v1215 = vld [vmem:[#allocation9 + $0xc4] sm:$0xf]
          %v1216 = vld [vmem:[#allocation9 + $0xc8] sm:$0xf]
          %v1217 = vld [vmem:[#allocation9 + $0xcc] sm:$0xf]
          %v1218 = vld [vmem:[#allocation9 + $0xd0] sm:$0xf]
          %v1219 = vld [vmem:[#allocation9 + $0xd4] sm:$0xf]
          %v1220 = vld [vmem:[#allocation9 + $0xd8] sm:$0xf]
          %v1221 = vld [vmem:[#allocation9 + $0xdc] sm:$0xf]
          %v1222 = vld [vmem:[#allocation9 + $0xe0] sm:$0xf]
          %v1223 = vld [vmem:[#allocation9 + $0xe4] sm:$0xf]
          %v1224 = vld [vmem:[#allocation9 + $0xe8] sm:$0xf]
          %v1225 = vld [vmem:[#allocation9 + $0xec] sm:$0xf]
          %v1226 = vld [vmem:[#allocation9 + $0xf0] sm:$0xf]
          %v1227 = vld [vmem:[#allocation9 + $0xf4] sm:$0xf]
          %v1228 = vld [vmem:[#allocation9 + $0xf8] sm:$0xf]
          %v1229 = vld [vmem:[#allocation9 + $0xfc] sm:$0xf]
          %v1230 = vld [vmem:[#allocation9 + $0x100] sm:$0xf]
          %v1231 = vld [vmem:[#allocation9 + $0x104] sm:$0xf]
          %v1232 = vld [vmem:[#allocation9 + $0x108] sm:$0xf]
          %v1233 = vld [vmem:[#allocation9 + $0x10c] sm:$0xf]
          %v1234 = vld [vmem:[#allocation9 + $0x110] sm:$0xf]
          %v1235 = vld [vmem:[#allocation9 + $0x114] sm:$0xf]
          %v1236 = vld [vmem:[#allocation9 + $0x118] sm:$0xf]
          %v1237 = vld [vmem:[#allocation9 + $0x11c] sm:$0xf]
          %v1238 = vld [vmem:[#allocation9 + $0x120] sm:$0xf]
          %v1239 = vld [vmem:[#allocation9 + $0x124] sm:$0xf]
          %v1240 = vld [vmem:[#allocation9 + $0x128] sm:$0xf]
          %v1241 = vld [vmem:[#allocation9 + $0x12c] sm:$0xf]
          %v1242 = vld [vmem:[#allocation9 + $0x130] sm:$0xf]
          %v1243 = vld [vmem:[#allocation9 + $0x134] sm:$0xf]
          %v1244 = vld [vmem:[#allocation9 + $0x138] sm:$0xf]
          %v1245 = vld [vmem:[#allocation9 + $0x13c] sm:$0xf]
          %v1246 = vld [vmem:[#allocation9 + $0x140] sm:$0xf]
          %v1247 = vld [vmem:[#allocation9 + $0x144] sm:$0xf]
          %v1248 = vld [vmem:[#allocation9 + $0x148] sm:$0xf]
          %v1249 = vld [vmem:[#allocation9 + $0x14c] sm:$0xf]
          %v1250 = vld [vmem:[#allocation9 + $0x150] sm:$0xf]
          %v1251 = vld [vmem:[#allocation9 + $0x154] sm:$0xf]
          %v1252 = vld [vmem:[#allocation9 + $0x158] sm:$0xf]
          %v1253 = vld [vmem:[#allocation9 + $0x15c] sm:$0xf]
          %v1254 = vld [vmem:[#allocation9 + $0x160] sm:$0xf]
          %v1255 = vld [vmem:[#allocation9 + $0x164] sm:$0xf]
          %v1256 = vld [vmem:[#allocation9 + $0x168] sm:$0xf]
          %v1257 = vld [vmem:[#allocation9 + $0x16c] sm:$0xf]
          %v1258 = vld [vmem:[#allocation9 + $0x170] sm:$0xf]
          %v1259 = vld [vmem:[#allocation9 + $0x174] sm:$0xf]
          %v1260 = vld [vmem:[#allocation9 + $0x178] sm:$0xf]
          %v1261 = vld [vmem:[#allocation9 + $0x17c] sm:$0xf]
          %v1262 = vld [vmem:[#allocation9 + $0x180] sm:$0xf]
          %v1263 = vld [vmem:[#allocation9 + $0x184] sm:$0xf]
          %v1264 = vld [vmem:[#allocation9 + $0x188] sm:$0xf]
          %v1265 = vld [vmem:[#allocation9 + $0x18c] sm:$0xf]
          %v1266 = vld [vmem:[#allocation9 + $0x190] sm:$0xf]
          %v1267 = vld [vmem:[#allocation9 + $0x194] sm:$0xf]
          %v1268 = vld [vmem:[#allocation9 + $0x198] sm:$0xf]
          %v1269 = vld [vmem:[#allocation9 + $0x19c] sm:$0xf]
          %v1270 = vld [vmem:[#allocation9 + $0x1a0] sm:$0xf]
          %v1271 = vld [vmem:[#allocation9 + $0x1a4] sm:$0xf]
          %v1272 = vld [vmem:[#allocation9 + $0x1a8] sm:$0xf]
          %v1273 = vld [vmem:[#allocation9 + $0x1ac] sm:$0xf]
          %v1274 = vld [vmem:[#allocation9 + $0x1b0] sm:$0xf]
          %v1275 = vld [vmem:[#allocation9 + $0x1b4] sm:$0xf]
          %v1276 = vld [vmem:[#allocation9 + $0x1b8] sm:$0xf]
          %v1277 = vld [vmem:[#allocation9 + $0x1bc] sm:$0xf]
          %v1278 = vld [vmem:[#allocation9 + $0x1c0] sm:$0xf]
          %v1279 = vld [vmem:[#allocation9 + $0x1c4] sm:$0xf]
          %v1280 = vld [vmem:[#allocation9 + $0x1c8] sm:$0xf]
          %v1281 = vld [vmem:[#allocation9 + $0x1cc] sm:$0xf]
          %v1282 = vld [vmem:[#allocation9 + $0x1d0] sm:$0xf]
          %v1283 = vld [vmem:[#allocation9 + $0x1d4] sm:$0xf]
          %v1284 = vld [vmem:[#allocation9 + $0x1d8] sm:$0xf]
          %v1285 = vld [vmem:[#allocation9 + $0x1dc] sm:$0xf]
          %v1286 = vld [vmem:[#allocation9 + $0x1e0] sm:$0xf]
          %v1287 = vld [vmem:[#allocation9 + $0x1e4] sm:$0xf]
          %v1288 = vld [vmem:[#allocation9 + $0x1e8] sm:$0xf]
          %v1289 = vld [vmem:[#allocation9 + $0x1ec] sm:$0xf]
          %v1290 = vld [vmem:[#allocation9 + $0x1f0] sm:$0xf]
          %v1291 = vld [vmem:[#allocation9 + $0x1f4] sm:$0xf]
          %v1292 = vld [vmem:[#allocation9 + $0x1f8] sm:$0xf]
          %v1293 = vld [vmem:[#allocation9 + $0x1fc] sm:$0xf]
          %v1294 = vld [vmem:[%s4] sm:$0x1]
          %v1423 = vunpack.c.l.b16 %v1166
          %v1424 = vunpack.c.l.b16 %v1167
          %v1425 = vunpack.c.l.b16 %v1168
          %v1426 = vunpack.c.l.b16 %v1169
          %v1427 = vunpack.c.l.b16 %v1170
          %v1428 = vunpack.c.l.b16 %v1171
          %v1429 = vunpack.c.l.b16 %v1172
          %v1430 = vunpack.c.l.b16 %v1173
          %v1431 = vunpack.c.l.b16 %v1174
          %v1432 = vunpack.c.l.b16 %v1175
          %v1433 = vunpack.c.l.b16 %v1176
          %v1434 = vunpack.c.l.b16 %v1177
          %v1435 = vunpack.c.l.b16 %v1178
          %v1436 = vunpack.c.l.b16 %v1179
          %v1437 = vunpack.c.l.b16 %v1180
          %v1438 = vunpack.c.l.b16 %v1181
          %v1439 = vunpack.c.l.b16 %v1182
          %v1440 = vunpack.c.l.b16 %v1183
          %v1441 = vunpack.c.l.b16 %v1184
          %v1442 = vunpack.c.l.b16 %v1185
          %v1443 = vunpack.c.l.b16 %v1186
          %v1444 = vunpack.c.l.b16 %v1187
          %v1445 = vunpack.c.l.b16 %v1188
          %v1446 = vunpack.c.l.b16 %v1189
          %v1447 = vunpack.c.l.b16 %v1190
          %v1448 = vunpack.c.l.b16 %v1191
          %v1449 = vunpack.c.l.b16 %v1192
          %v1450 = vunpack.c.l.b16 %v1193
          %v1451 = vunpack.c.l.b16 %v1194
          %v1452 = vunpack.c.l.b16 %v1195
          %v1453 = vunpack.c.l.b16 %v1196
          %v1454 = vunpack.c.l.b16 %v1197
          %v1455 = vunpack.c.l.b16 %v1198
          %v1456 = vunpack.c.l.b16 %v1199
          %v1457 = vunpack.c.l.b16 %v1200
          %v1458 = vunpack.c.l.b16 %v1201
          %v1459 = vunpack.c.l.b16 %v1202
          %v1460 = vunpack.c.l.b16 %v1203
          %v1461 = vunpack.c.l.b16 %v1204
          %v1462 = vunpack.c.l.b16 %v1205
          %v1463 = vunpack.c.l.b16 %v1206
          %v1464 = vunpack.c.l.b16 %v1207
          %v1465 = vunpack.c.l.b16 %v1208
          %v1466 = vunpack.c.l.b16 %v1209
          %v1467 = vunpack.c.l.b16 %v1210
          %v1468 = vunpack.c.l.b16 %v1211
          %v1469 = vunpack.c.l.b16 %v1212
          %v1470 = vunpack.c.l.b16 %v1213
          %v1471 = vunpack.c.l.b16 %v1214
          %v1472 = vunpack.c.l.b16 %v1215
          %v1473 = vunpack.c.l.b16 %v1216
          %v1474 = vunpack.c.l.b16 %v1217
          %v1475 = vunpack.c.l.b16 %v1218
          %v1476 = vunpack.c.l.b16 %v1219
          %v1477 = vunpack.c.l.b16 %v1220
          %v1478 = vunpack.c.l.b16 %v1221
          %v1479 = vunpack.c.l.b16 %v1222
          %v1480 = vunpack.c.l.b16 %v1223
          %v1481 = vunpack.c.l.b16 %v1224
          %v1482 = vunpack.c.l.b16 %v1225
          %v1483 = vunpack.c.l.b16 %v1226
          %v1484 = vunpack.c.l.b16 %v1227
          %v1485 = vunpack.c.l.b16 %v1228
          %v1486 = vunpack.c.l.b16 %v1229
          %v1487 = vunpack.c.l.b16 %v1230
          %v1488 = vunpack.c.l.b16 %v1231
          %v1489 = vunpack.c.l.b16 %v1232
          %v1490 = vunpack.c.l.b16 %v1233
          %v1491 = vunpack.c.l.b16 %v1234
          %v1492 = vunpack.c.l.b16 %v1235
          %v1493 = vunpack.c.l.b16 %v1236
          %v1494 = vunpack.c.l.b16 %v1237
          %v1495 = vunpack.c.l.b16 %v1238
          %v1496 = vunpack.c.l.b16 %v1239
          %v1497 = vunpack.c.l.b16 %v1240
          %v1498 = vunpack.c.l.b16 %v1241
          %v1499 = vunpack.c.l.b16 %v1242
          %v1500 = vunpack.c.l.b16 %v1243
          %v1501 = vunpack.c.l.b16 %v1244
          %v1502 = vunpack.c.l.b16 %v1245
          %v1503 = vunpack.c.l.b16 %v1246
          %v1504 = vunpack.c.l.b16 %v1247
          %v1505 = vunpack.c.l.b16 %v1248
          %v1506 = vunpack.c.l.b16 %v1249
          %v1507 = vunpack.c.l.b16 %v1250
          %v1508 = vunpack.c.l.b16 %v1251
          %v1509 = vunpack.c.l.b16 %v1252
          %v1510 = vunpack.c.l.b16 %v1253
          %v1511 = vunpack.c.l.b16 %v1254
          %v1512 = vunpack.c.l.b16 %v1255
          %v1513 = vunpack.c.l.b16 %v1256
          %v1514 = vunpack.c.l.b16 %v1257
          %v1515 = vunpack.c.l.b16 %v1258
          %v1516 = vunpack.c.l.b16 %v1259
          %v1517 = vunpack.c.l.b16 %v1260
          %v1518 = vunpack.c.l.b16 %v1261
          %v1519 = vunpack.c.l.b16 %v1262
          %v1520 = vunpack.c.l.b16 %v1263
          %v1521 = vunpack.c.l.b16 %v1264
          %v1522 = vunpack.c.l.b16 %v1265
          %v1523 = vunpack.c.l.b16 %v1266
          %v1524 = vunpack.c.l.b16 %v1267
          %v1525 = vunpack.c.l.b16 %v1268
          %v1526 = vunpack.c.l.b16 %v1269
          %v1527 = vunpack.c.l.b16 %v1270
          %v1528 = vunpack.c.l.b16 %v1271
          %v1529 = vunpack.c.l.b16 %v1272
          %v1530 = vunpack.c.l.b16 %v1273
          %v1531 = vunpack.c.l.b16 %v1274
          %v1532 = vunpack.c.l.b16 %v1275
          %v1533 = vunpack.c.l.b16 %v1276
          %v1534 = vunpack.c.l.b16 %v1277
          %v1535 = vunpack.c.l.b16 %v1278
          %v1536 = vunpack.c.l.b16 %v1279
          %v1537 = vunpack.c.l.b16 %v1280
          %v1538 = vunpack.c.l.b16 %v1281
          %v1539 = vunpack.c.l.b16 %v1282
          %v1540 = vunpack.c.l.b16 %v1283
          %v1541 = vunpack.c.l.b16 %v1284
          %v1542 = vunpack.c.l.b16 %v1285
          %v1543 = vunpack.c.l.b16 %v1286
          %v1544 = vunpack.c.l.b16 %v1287
          %v1545 = vunpack.c.l.b16 %v1288
          %v1546 = vunpack.c.l.b16 %v1289
          %v1547 = vunpack.c.l.b16 %v1290
          %v1548 = vunpack.c.l.b16 %v1291
          %v1549 = vunpack.c.l.b16 %v1292
          %v1550 = vunpack.c.l.b16 %v1293
          %v1551 = vpack.c.b16 %v1424, %v1423
          %v1552 = vpack.c.b16 %v1426, %v1425
          %v1553 = vpack.c.b16 %v1428, %v1427
          %v1554 = vpack.c.b16 %v1430, %v1429
          %v1555 = vpack.c.b16 %v1432, %v1431
          %v1556 = vpack.c.b16 %v1434, %v1433
          %v1557 = vpack.c.b16 %v1436, %v1435
          %v1558 = vpack.c.b16 %v1438, %v1437
          %v1559 = vpack.c.b16 %v1440, %v1439
          %v1560 = vpack.c.b16 %v1442, %v1441
          %v1561 = vpack.c.b16 %v1444, %v1443
          %v1562 = vpack.c.b16 %v1446, %v1445
          %v1563 = vpack.c.b16 %v1448, %v1447
          %v1564 = vpack.c.b16 %v1450, %v1449
          %v1565 = vpack.c.b16 %v1452, %v1451
          %v1566 = vpack.c.b16 %v1454, %v1453
          %v1567 = vpack.c.b16 %v1456, %v1455
          %v1568 = vpack.c.b16 %v1458, %v1457
          %v1569 = vpack.c.b16 %v1460, %v1459
          %v1570 = vpack.c.b16 %v1462, %v1461
          %v1571 = vpack.c.b16 %v1464, %v1463
          %v1572 = vpack.c.b16 %v1466, %v1465
          %v1573 = vpack.c.b16 %v1468, %v1467
          %v1574 = vpack.c.b16 %v1470, %v1469
          %v1575 = vpack.c.b16 %v1472, %v1471
          %v1576 = vpack.c.b16 %v1474, %v1473
          %v1577 = vpack.c.b16 %v1476, %v1475
          %v1578 = vpack.c.b16 %v1478, %v1477
          %v1579 = vpack.c.b16 %v1480, %v1479
          %v1580 = vpack.c.b16 %v1482, %v1481
          %v1581 = vpack.c.b16 %v1484, %v1483
          %v1582 = vpack.c.b16 %v1486, %v1485
          %v1583 = vpack.c.b16 %v1488, %v1487
          %v1584 = vpack.c.b16 %v1490, %v1489
          %v1585 = vpack.c.b16 %v1492, %v1491
          %v1586 = vpack.c.b16 %v1494, %v1493
          %v1587 = vpack.c.b16 %v1496, %v1495
          %v1588 = vpack.c.b16 %v1498, %v1497
          %v1589 = vpack.c.b16 %v1500, %v1499
          %v1590 = vpack.c.b16 %v1502, %v1501
          %v1591 = vpack.c.b16 %v1504, %v1503
          %v1592 = vpack.c.b16 %v1506, %v1505
          %v1593 = vpack.c.b16 %v1508, %v1507
          %v1594 = vpack.c.b16 %v1510, %v1509
          %v1595 = vpack.c.b16 %v1512, %v1511
          %v1596 = vpack.c.b16 %v1514, %v1513
          %v1597 = vpack.c.b16 %v1516, %v1515
          %v1598 = vpack.c.b16 %v1518, %v1517
          %v1599 = vpack.c.b16 %v1520, %v1519
          %v1600 = vpack.c.b16 %v1522, %v1521
          %v1601 = vpack.c.b16 %v1524, %v1523
          %v1602 = vpack.c.b16 %v1526, %v1525
          %v1603 = vpack.c.b16 %v1528, %v1527
          %v1604 = vpack.c.b16 %v1530, %v1529
          %v1605 = vpack.c.b16 %v1532, %v1531
          %v1606 = vpack.c.b16 %v1534, %v1533
          %v1607 = vpack.c.b16 %v1536, %v1535
          %v1608 = vpack.c.b16 %v1538, %v1537
          %v1609 = vpack.c.b16 %v1540, %v1539
          %v1610 = vpack.c.b16 %v1542, %v1541
          %v1611 = vpack.c.b16 %v1544, %v1543
          %v1612 = vpack.c.b16 %v1546, %v1545
          %v1613 = vpack.c.b16 %v1548, %v1547
          %v1614 = vpack.c.b16 %v1550, %v1549
          %1679 = vmatprep.subr.bf16.mxu0 0
          %1680 = vmatpush1.bf16.msra.mxu0 %v1551
          %1681 = vmatprep.subr.bf16.mxu0 0
          %1682 = vmatpush1.bf16.msra.mxu0 %v1552
          %1683 = vmatprep.subr.bf16.mxu0 0
          %1684 = vmatpush1.bf16.msra.mxu0 %v1553
          %1685 = vmatprep.subr.bf16.mxu0 0
          %1686 = vmatpush1.bf16.msra.mxu0 %v1554
          %1687 = vmatprep.subr.bf16.mxu0 0
          %1688 = vmatpush1.bf16.msra.mxu0 %v1555
          %1689 = vmatprep.subr.bf16.mxu0 0
          %1690 = vmatpush1.bf16.msra.mxu0 %v1556
          %1691 = vmatprep.subr.bf16.mxu0 0
          %1692 = vmatpush1.bf16.msra.mxu0 %v1557
          %1693 = vmatprep.subr.bf16.mxu0 0
          %1694 = vmatpush1.bf16.msra.mxu0 %v1558
          %1695 = vmatprep.subr.bf16.mxu0 0
          %1696 = vmatpush1.bf16.msra.mxu0 %v1559
          %1697 = vmatprep.subr.bf16.mxu0 0
          %1698 = vmatpush1.bf16.msra.mxu0 %v1560
          %1699 = vmatprep.subr.bf16.mxu0 0
          %1700 = vmatpush1.bf16.msra.mxu0 %v1561
          %1701 = vmatprep.subr.bf16.mxu0 0
          %1702 = vmatpush1.bf16.msra.mxu0 %v1562
          %1703 = vmatprep.subr.bf16.mxu0 0
          %1704 = vmatpush1.bf16.msra.mxu0 %v1563
          %1705 = vmatprep.subr.bf16.mxu0 0
          %1706 = vmatpush1.bf16.msra.mxu0 %v1564
          %1707 = vmatprep.subr.bf16.mxu0 0
          %1708 = vmatpush1.bf16.msra.mxu0 %v1565
          %1709 = vmatprep.subr.bf16.mxu0 0
          %1710 = vmatpush1.bf16.msra.mxu0 %v1566
          %1711 = vmatprep.mubr.bf16.mxu0 %v1159
          %1712 = vmatmul.mubr.bf16.gmra.mrb[0].mxu0 %v1158
          %v1713 = vpop.f32.mrb[0].mxu0
          %v1714 = vadd.f32 %v1294, %v1713
          %v1715 = vpop.f32.mrb[0].mxu0
          %v1716 = vpop.f32.mrb[0].mxu0
          %v1717 = vpop.f32.mrb[0].mxu0
          %1718 = vdwg.mxu0
          %1719 = vmatprep.subr.bf16.mxu0 0
          %1720 = vmatpush1.bf16.msra.mxu0 %v1567
          %1721 = vmatprep.subr.bf16.mxu0 0
          %1722 = vmatpush1.bf16.msra.mxu0 %v1568
          %1723 = vmatprep.subr.bf16.mxu0 0
          %1724 = vmatpush1.bf16.msra.mxu0 %v1569
          %1725 = vmatprep.subr.bf16.mxu0 0
          %1726 = vmatpush1.bf16.msra.mxu0 %v1570
          %1727 = vmatprep.subr.bf16.mxu0 0
          %1728 = vmatpush1.bf16.msra.mxu0 %v1571
          %1729 = vmatprep.subr.bf16.mxu0 0
          %1730 = vmatpush1.bf16.msra.mxu0 %v1572
          %1731 = vmatprep.subr.bf16.mxu0 0
          %1732 = vmatpush1.bf16.msra.mxu0 %v1573
          %1733 = vmatprep.subr.bf16.mxu0 0
          %1734 = vmatpush1.bf16.msra.mxu0 %v1574
          %1735 = vmatprep.subr.bf16.mxu0 0
          %1736 = vmatpush1.bf16.msra.mxu0 %v1575
          %1737 = vmatprep.subr.bf16.mxu0 0
          %1738 = vmatpush1.bf16.msra.mxu0 %v1576
          %1739 = vmatprep.subr.bf16.mxu0 0
          %1740 = vmatpush1.bf16.msra.mxu0 %v1577
          %1741 = vmatprep.subr.bf16.mxu0 0
          %1742 = vmatpush1.bf16.msra.mxu0 %v1578
          %1743 = vmatprep.subr.bf16.mxu0 0
          %1744 = vmatpush1.bf16.msra.mxu0 %v1579
          %1745 = vmatprep.subr.bf16.mxu0 0
          %1746 = vmatpush1.bf16.msra.mxu0 %v1580
          %1747 = vmatprep.subr.bf16.mxu0 0
          %1748 = vmatpush1.bf16.msra.mxu0 %v1581
          %1749 = vmatprep.subr.bf16.mxu0 0
          %1750 = vmatpush1.bf16.msra.mxu0 %v1582
          %1751 = vmatprep.mubr.bf16.mxu0 %v1161
          %1752 = vmatmul.mubr.bf16.gmra.mrb[0].mxu0 %v1160
          %v1753 = vpop.f32.mrb[0].mxu0
          %v1754 = vadd.f32 %v1714, %v1753
          %v1755 = vpop.f32.mrb[0].mxu0
          %v1756 = vpop.f32.mrb[0].mxu0
          %v1757 = vpop.f32.mrb[0].mxu0
          %1758 = vdwg.mxu0
          %1759 = vmatprep.subr.bf16.mxu0 0
          %1760 = vmatpush1.bf16.msra.mxu0 %v1583
          %1761 = vmatprep.subr.bf16.mxu0 0
          %1762 = vmatpush1.bf16.msra.mxu0 %v1584
          %1763 = vmatprep.subr.bf16.mxu0 0
          %1764 = vmatpush1.bf16.msra.mxu0 %v1585
          %1765 = vmatprep.subr.bf16.mxu0 0
          %1766 = vmatpush1.bf16.msra.mxu0 %v1586
          %1767 = vmatprep.subr.bf16.mxu0 0
          %1768 = vmatpush1.bf16.msra.mxu0 %v1587
          %1769 = vmatprep.subr.bf16.mxu0 0
          %1770 = vmatpush1.bf16.msra.mxu0 %v1588
          %1771 = vmatprep.subr.bf16.mxu0 0
          %1772 = vmatpush1.bf16.msra.mxu0 %v1589
          %1773 = vmatprep.subr.bf16.mxu0 0
          %1774 = vmatpush1.bf16.msra.mxu0 %v1590
          %1775 = vmatprep.subr.bf16.mxu0 0
          %1776 = vmatpush1.bf16.msra.mxu0 %v1591
          %1777 = vmatprep.subr.bf16.mxu0 0
          %1778 = vmatpush1.bf16.msra.mxu0 %v1592
          %1779 = vmatprep.subr.bf16.mxu0 0
          %1780 = vmatpush1.bf16.msra.mxu0 %v1593
          %1781 = vmatprep.subr.bf16.mxu0 0
          %1782 = vmatpush1.bf16.msra.mxu0 %v1594
          %1783 = vmatprep.subr.bf16.mxu0 0
          %1784 = vmatpush1.bf16.msra.mxu0 %v1595
          %1785 = vmatprep.subr.bf16.mxu0 0
          %1786 = vmatpush1.bf16.msra.mxu0 %v1596
          %1787 = vmatprep.subr.bf16.mxu0 0
          %1788 = vmatpush1.bf16.msra.mxu0 %v1597
          %1789 = vmatprep.subr.bf16.mxu0 0
          %1790 = vmatpush1.bf16.msra.mxu0 %v1598
          %1791 = vmatprep.mubr.bf16.mxu0 %v1163
          %1792 = vmatmul.mubr.bf16.gmra.mrb[0].mxu0 %v1162
          %v1793 = vpop.f32.mrb[0].mxu0
          %v1794 = vadd.f32 %v1754, %v1793
          %v1795 = vpop.f32.mrb[0].mxu0
          %v1796 = vpop.f32.mrb[0].mxu0
          %v1797 = vpop.f32.mrb[0].mxu0
          %1798 = vdwg.mxu0
          %1799 = vmatprep.subr.bf16.mxu0 0
          %1800 = vmatpush1.bf16.msra.mxu0 %v1599
          %1801 = vmatprep.subr.bf16.mxu0 0
          %1802 = vmatpush1.bf16.msra.mxu0 %v1600
          %1803 = vmatprep.subr.bf16.mxu0 0
          %1804 = vmatpush1.bf16.msra.mxu0 %v1601
          %1805 = vmatprep.subr.bf16.mxu0 0
          %1806 = vmatpush1.bf16.msra.mxu0 %v1602
          %1807 = vmatprep.subr.bf16.mxu0 0
          %1808 = vmatpush1.bf16.msra.mxu0 %v1603
          %1809 = vmatprep.subr.bf16.mxu0 0
          %1810 = vmatpush1.bf16.msra.mxu0 %v1604
          %1811 = vmatprep.subr.bf16.mxu0 0
          %1812 = vmatpush1.bf16.msra.mxu0 %v1605
          %1813 = vmatprep.subr.bf16.mxu0 0
          %1814 = vmatpush1.bf16.msra.mxu0 %v1606
          %1815 = vmatprep.subr.bf16.mxu0 0
          %1816 = vmatpush1.bf16.msra.mxu0 %v1607
          %1817 = vmatprep.subr.bf16.mxu0 0
          %1818 = vmatpush1.bf16.msra.mxu0 %v1608
          %1819 = vmatprep.subr.bf16.mxu0 0
          %1820 = vmatpush1.bf16.msra.mxu0 %v1609
          %1821 = vmatprep.subr.bf16.mxu0 0
          %1822 = vmatpush1.bf16.msra.mxu0 %v1610
          %1823 = vmatprep.subr.bf16.mxu0 0
          %1824 = vmatpush1.bf16.msra.mxu0 %v1611
          %1825 = vmatprep.subr.bf16.mxu0 0
          %1826 = vmatpush1.bf16.msra.mxu0 %v1612
          %1827 = vmatprep.subr.bf16.mxu0 0
          %1828 = vmatpush1.bf16.msra.mxu0 %v1613
          %1829 = vmatprep.subr.bf16.mxu0 0
          %1830 = vmatpush1.bf16.msra.mxu0 %v1614
          %1831 = vmatprep.mubr.bf16.mxu0 %v1165
          %1832 = vmatmul.mubr.bf16.gmra.mrb[0].mxu0 %v1164
          %v1833 = vpop.f32.mrb[0].mxu0
          %v1834 = vadd.f32 %v1794, %v1833
          %v1835 = vpop.f32.mrb[0].mxu0
          %v1836 = vpop.f32.mrb[0].mxu0
          %v1837 = vpop.f32.mrb[0].mxu0
          %1838 = vdwg.mxu0
          %1839 = vst [vmem:[%s297] sm:$0x1] %v1834
        $region64: #{tpu_custom_call.1} parent=39 // pred_fallthru
          _
        %s1840 = sand.u32 %s156, 1
        %s1841 = scalar_lea.sflag [#allocation5], %s1840
        %s1842 = sand.u32 %s156, 1
        %s1843 = scalar_lea.vmem [#allocation11], %s1842
        // Predicated region
        $region65: #{tpu_custom_call.1} parent=39 // pred_check
          %p1844 = pneg %p166
        $region66: #{tpu_custom_call.1} parent=39 // pred_check_branch
          %1846 = sbr.rel (%p1844) target = $region68
        $region67: #{tpu_custom_call.1} parent=39 // pred_region
          %s1848 = ssub.s32 16, 16
          %1849 = vsyncadd %s1841, %s1848
          %s1850 = smul.addr %s28, 16
          %s1851 = scalar_lea.hbm %s5, %s1850
          %s1853 = sshll.u32 %s1843, 4
          %s1854 = int_to_ptr.vmem [resolvable:$true] %s1853
          %1856 = dma.vmem_to_hbm [thread:$0]  %s1854, 16, %s1851, %s1841
        $region68: #{tpu_custom_call.1} parent=39 // pred_fallthru
          _
      $region40: #{tpu_custom_call.1} parent=5 // pred_fallthru
        _
      %p1857 = scmp.le.s32.totalorder 2, %s19
      // Predicated region
      $region69: #{tpu_custom_call.1} parent=5 // pred_check
        %p1858 = pneg %p1857
      $region70: #{tpu_custom_call.1} parent=5 // pred_check_branch
        %1860 = sbr.rel (%p1858) target = $region72
      $region71: #{tpu_custom_call.1} parent=5 // pred_region
        %s1861 = ssub.s32 %s19, 2
        // Predicated region
        $region73: #{tpu_custom_call.1} parent=71 // pred_check
          %p1862 = pneg %p172
        $region74: #{tpu_custom_call.1} parent=71 // pred_check_branch
          %1864 = sbr.rel (%p1862) target = $region76
        $region75: #{tpu_custom_call.1} parent=71 // pred_region
          %s1865 = sand.u32 %s157, 1
          %s1866 = scalar_lea.sflag [#allocation5], %s1865
          %s1867 = sand.u32 %s157, 1
          %s1868 = scalar_lea.vmem [#allocation11], %s1867
          %1869 = dma.done %s1866, 16
        $region76: #{tpu_custom_call.1} parent=71 // pred_fallthru
          _
      $region72: #{tpu_custom_call.1} parent=5 // pred_fallthru
        _
    $region6: #{tpu_custom_call.1} parent=1 // loop_footer
      %s23 = sadd.s32 1, %s19
    $region7: #{tpu_custom_call.1} parent=1 // loop_footer_branch
      %18 = sbr.rel target = $region3
    $region8: #{tpu_custom_call.1} parent=1 // loop_exit
      _
    %1870 = vsyncpa [#allocation4], 1
    %s1871 = scalar_lea.sflag [#allocation4], 1
    %1872 = vsyncpa %s1871, 1
    %1873 = vsyncpa [#allocation7], 1
    %1874 = vsyncpa [#allocation10], 1
    %1875 = vsyncpa [#allocation5], 1
    %s1876 = scalar_lea.sflag [#allocation5], 1
    %1877 = vsyncpa %s1876, 1

</llo_original>
